<compile_context>
chip_gen: v7x
topology: tpu7x:2x2x1
jax: 0.10.0
libtpu: 0.0.40
codegen_flags: <defaults>
</compile_context>

<pallas_src>
import jax
import jax.numpy as jnp
from jax import lax
from jax.experimental import pallas as pl
from jax.experimental.pallas import tpu as pltpu


IN_DIM = 4
HID_DIM = 8
OUT_DIM = 3
# Per-layer (out, in) shapes, torch nn.Linear layout.
LAYER_DIMS = ((HID_DIM, IN_DIM), (HID_DIM, HID_DIM),
              (HID_DIM, HID_DIM), (OUT_DIM, HID_DIM))
NEG_SLOPE = 0.01                 # torch.nn.LeakyReLU default negative_slope

LANES = 128                      # vreg lane width
SUBLANES = 8                     # f32 vreg sublanes
CHUNK_ROWS = 2 * SUBLANES        # inner chunk: 2 vregs / feature plane (~40 live vregs)
TARGET_TILE_ROWS = 256           # 256 rows x 128 lanes = 32K batch elems / grid step
PARAM_COUNT = sum(od * idim + od for od, idim in LAYER_DIMS)   # 211 scalars


def _round_up(a, b):
    return (a + b - 1) // b * b


def _flatten_params(params):
    """Concatenate w1,b1,...,w4,b4 (row-major) into one flat f32 vector."""
    parts = []
    for idx in range(1, 5):
        parts.append(params[f"w{idx}"].reshape(-1))
        parts.append(params[f"b{idx}"].reshape(-1))
    return jnp.concatenate(parts).astype(jnp.float32)


def irisnet_kernel(wb_ref, x_ref, o_ref):
    """wb_ref: SMEM f32[211]; x_ref: VMEM [4, R, 128]; o_ref: VMEM [3, R, 128]."""
    # Read every weight/bias once per grid step (SMEM scalar loads, hoisted
    # outside the batch-chunk loop).
    off = 0
    weights, biases = [], []
    for od, idim in LAYER_DIMS:
        w = [[wb_ref[off + o * idim + i] for i in range(idim)] for o in range(od)]
        off += od * idim
        b = [wb_ref[off + o] for o in range(od)]
        off += od
        weights.append(w)
        biases.append(b)

    def process_chunk(r0, ch):
        # ch is a static Python int; r0 may be dynamic.
        h = [x_ref[i, pl.ds(r0, ch), :] for i in range(IN_DIM)]     # [ch, 128] planes
        for layer, (od, idim) in enumerate(LAYER_DIMS):
            w, b = weights[layer], biases[layer]
            nxt = []
            for o in range(od):                       # unrolled scalar FMAs on the VPU
                acc = h[0] * w[o][0]
                for i in range(1, idim):
                    acc = acc + h[i] * w[o][i]
                acc = acc + b[o]
                if layer < len(LAYER_DIMS) - 1:
                    acc = jnp.maximum(acc, NEG_SLOPE * acc)   # 2-op LeakyReLU
                nxt.append(acc)
            h = nxt
        for o in range(OUT_DIM):                      # lane-dense, unmasked stores
            o_ref[o, pl.ds(r0, ch), :] = h[o]

    tile_rows = x_ref.shape[1]                        # static, multiple of 8
    n_main = tile_rows // CHUNK_ROWS
    tail = tile_rows % CHUNK_ROWS                     # 0 or 8

    if n_main > 0:
        def body(c, carry):
            process_chunk(pl.multiple_of(c * CHUNK_ROWS, CHUNK_ROWS), CHUNK_ROWS)
            return carry
        lax.fori_loop(0, n_main, body, 0)
    if tail:
        process_chunk(n_main * CHUNK_ROWS, tail)


def irisnet_forward(x, params, *, target_tile_rows=TARGET_TILE_ROWS):
    """x: [B, 4] float32. params: w1..w4 as [out, in], b1..b4 as [out]."""
    B = x.shape[0]
    n_rows = pl.cdiv(B, LANES)
    n_rows_p = max(SUBLANES, _round_up(n_rows, SUBLANES))
    b_pad = n_rows_p * LANES

    # [B,4] -> dense feature planes [4, rows, 128]; pad only to the 8x128 vreg
    # footprint (<= 1023 wasted elements), never to a full tile.
    xt = jnp.pad(x.T.astype(jnp.float32), ((0, 0), (0, b_pad - B)))
    xp = xt.reshape(IN_DIM, n_rows_p, LANES)

    if n_rows_p <= SUBLANES:
        tile_rows = n_rows_p                           # tiny batch: single full block
    else:
        # Keep >=2 grid tiles whenever possible so v7x megacore can split the
        # batch; cap the tile at ~32K elements (small vs. every VMEM budget).
        tile_rows = min(target_tile_rows, _round_up(pl.cdiv(n_rows_p, 2), SUBLANES))
    grid = (pl.cdiv(n_rows_p, tile_rows),)             # ragged last block is fine

    wb = _flatten_params(params)

    # 2*(4*8+8*8+8*8+8*3) = 368 flops/elem; 28 B/elem streamed.  NOTE: the
    # kernel is VALU-bound; this estimate is only a scheduling hint for XLA.
    cost = pl.CostEstimate(flops=368 * b_pad, transcendentals=0,
                           bytes_accessed=28 * b_pad + PARAM_COUNT * 4)

    yt = pl.pallas_call(
        irisnet_kernel,
        out_shape=jax.ShapeDtypeStruct((OUT_DIM, n_rows_p, LANES), jnp.float32),
        grid=grid,
        in_specs=[
            pl.BlockSpec(memory_space=pltpu.MemorySpace.SMEM),          # all params
            pl.BlockSpec((IN_DIM, tile_rows, LANES), lambda i: (0, i, 0)),
        ],
        out_specs=pl.BlockSpec((OUT_DIM, tile_rows, LANES), lambda i: (0, i, 0)),
        compiler_params=pltpu.CompilerParams(
            dimension_semantics=("parallel",)),        # megacore sharding on v7x
        cost_estimate=cost,
    )(wb, xp)

    return yt.reshape(OUT_DIM, b_pad)[:, :B].T         # back to [B, 3]


def init_params(key):
    """Deterministic init mimicking nn.Linear uniform(-1/sqrt(fan_in), ...).

    (torch actually uses kaiming_uniform(a=sqrt(5)) for weights; same support,
    irrelevant to kernel numerics.)  Weights torch-style [out, in], biases [out].
    """
    params = {}
    for idx, (fan_out, fan_in) in enumerate(LAYER_DIMS, start=1):
        key, kw, kb = jax.random.split(key, 3)
        bound = 1.0 / jnp.sqrt(float(fan_in))
        params[f"w{idx}"] = jax.random.uniform(
            kw, (fan_out, fan_in), jnp.float32, -bound, bound)
        params[f"b{idx}"] = jax.random.uniform(
            kb, (fan_out,), jnp.float32, -bound, bound)
    return params


def irisnet_reference(x, params):
    """Pure-JAX reference (standard [B, F] layout) for correctness checks."""
    h = x
    for i in range(1, 5):
        h = h @ params[f"w{i}"].T + params[f"b{i}"]
        if i < 4:
            h = jnp.where(h >= 0, h, NEG_SLOPE * h)
    return h


if __name__ == "__main__":
    key = jax.random.PRNGKey(0)
    key, kx = jax.random.split(key)
    batch = 8
    x = jax.random.normal(kx, (batch, IN_DIM), jnp.float32)

    params = init_params(jax.random.PRNGKey(0))

    out = jax.jit(irisnet_forward)(x, params)
    out = jax.block_until_ready(out)

    ref = irisnet_reference(x, params)
    assert out.shape == (batch, OUT_DIM), out.shape
    assert jnp.allclose(out, ref, atol=1e-5, rtol=1e-5), (out, ref)

    print("KERNEL_OK")
</pallas_src>

<mosaic_0001>
module attributes {stable_mosaic.version = 11 : i64} {
  func.func @irisnet_kernel(%arg0: i32, %arg1: memref<211xf32, #tpu.memory_space<smem>>, %arg2: memref<4x8x128xf32, #tpu.memory_space<vmem>>, %arg3: memref<3x8x128xf32, #tpu.memory_space<vmem>>) attributes {dimension_semantics = [#tpu.dimension_semantics<parallel>], iteration_bounds = array<i64: 1>, scalar_prefetch = 0 : i64, scratch_operands = 0 : i64, tpu.core_type = #tpu.core_type<tc>, window_params = [{transform_indices = @transform_0, window_bounds = array<i64: 211>}, {transform_indices = @transform_1, window_bounds = array<i64: 4, 8, 128>}, {transform_indices = @transform_2, window_bounds = array<i64: 3, 8, 128>}]} {
    %c0 = arith.constant 0 : index
    %0 = memref.load %arg1[%c0] : memref<211xf32, #tpu.memory_space<smem>>
    %c1 = arith.constant 1 : index
    %1 = memref.load %arg1[%c1] : memref<211xf32, #tpu.memory_space<smem>>
    %c2 = arith.constant 2 : index
    %2 = memref.load %arg1[%c2] : memref<211xf32, #tpu.memory_space<smem>>
    %c3 = arith.constant 3 : index
    %3 = memref.load %arg1[%c3] : memref<211xf32, #tpu.memory_space<smem>>
    %c4 = arith.constant 4 : index
    %4 = memref.load %arg1[%c4] : memref<211xf32, #tpu.memory_space<smem>>
    %c5 = arith.constant 5 : index
    %5 = memref.load %arg1[%c5] : memref<211xf32, #tpu.memory_space<smem>>
    %c6 = arith.constant 6 : index
    %6 = memref.load %arg1[%c6] : memref<211xf32, #tpu.memory_space<smem>>
    %c7 = arith.constant 7 : index
    %7 = memref.load %arg1[%c7] : memref<211xf32, #tpu.memory_space<smem>>
    %c8 = arith.constant 8 : index
    %8 = memref.load %arg1[%c8] : memref<211xf32, #tpu.memory_space<smem>>
    %c9 = arith.constant 9 : index
    %9 = memref.load %arg1[%c9] : memref<211xf32, #tpu.memory_space<smem>>
    %c10 = arith.constant 10 : index
    %10 = memref.load %arg1[%c10] : memref<211xf32, #tpu.memory_space<smem>>
    %c11 = arith.constant 11 : index
    %11 = memref.load %arg1[%c11] : memref<211xf32, #tpu.memory_space<smem>>
    %c12 = arith.constant 12 : index
    %12 = memref.load %arg1[%c12] : memref<211xf32, #tpu.memory_space<smem>>
    %c13 = arith.constant 13 : index
    %13 = memref.load %arg1[%c13] : memref<211xf32, #tpu.memory_space<smem>>
    %c14 = arith.constant 14 : index
    %14 = memref.load %arg1[%c14] : memref<211xf32, #tpu.memory_space<smem>>
    %c15 = arith.constant 15 : index
    %15 = memref.load %arg1[%c15] : memref<211xf32, #tpu.memory_space<smem>>
    %c16 = arith.constant 16 : index
    %16 = memref.load %arg1[%c16] : memref<211xf32, #tpu.memory_space<smem>>
    %c17 = arith.constant 17 : index
    %17 = memref.load %arg1[%c17] : memref<211xf32, #tpu.memory_space<smem>>
    %c18 = arith.constant 18 : index
    %18 = memref.load %arg1[%c18] : memref<211xf32, #tpu.memory_space<smem>>
    %c19 = arith.constant 19 : index
    %19 = memref.load %arg1[%c19] : memref<211xf32, #tpu.memory_space<smem>>
    %c20 = arith.constant 20 : index
    %20 = memref.load %arg1[%c20] : memref<211xf32, #tpu.memory_space<smem>>
    %c21 = arith.constant 21 : index
    %21 = memref.load %arg1[%c21] : memref<211xf32, #tpu.memory_space<smem>>
    %c22 = arith.constant 22 : index
    %22 = memref.load %arg1[%c22] : memref<211xf32, #tpu.memory_space<smem>>
    %c23 = arith.constant 23 : index
    %23 = memref.load %arg1[%c23] : memref<211xf32, #tpu.memory_space<smem>>
    %c24 = arith.constant 24 : index
    %24 = memref.load %arg1[%c24] : memref<211xf32, #tpu.memory_space<smem>>
    %c25 = arith.constant 25 : index
    %25 = memref.load %arg1[%c25] : memref<211xf32, #tpu.memory_space<smem>>
    %c26 = arith.constant 26 : index
    %26 = memref.load %arg1[%c26] : memref<211xf32, #tpu.memory_space<smem>>
    %c27 = arith.constant 27 : index
    %27 = memref.load %arg1[%c27] : memref<211xf32, #tpu.memory_space<smem>>
    %c28 = arith.constant 28 : index
    %28 = memref.load %arg1[%c28] : memref<211xf32, #tpu.memory_space<smem>>
    %c29 = arith.constant 29 : index
    %29 = memref.load %arg1[%c29] : memref<211xf32, #tpu.memory_space<smem>>
    %c30 = arith.constant 30 : index
    %30 = memref.load %arg1[%c30] : memref<211xf32, #tpu.memory_space<smem>>
    %c31 = arith.constant 31 : index
    %31 = memref.load %arg1[%c31] : memref<211xf32, #tpu.memory_space<smem>>
    %c32 = arith.constant 32 : index
    %32 = memref.load %arg1[%c32] : memref<211xf32, #tpu.memory_space<smem>>
    %c33 = arith.constant 33 : index
    %33 = memref.load %arg1[%c33] : memref<211xf32, #tpu.memory_space<smem>>
    %c34 = arith.constant 34 : index
    %34 = memref.load %arg1[%c34] : memref<211xf32, #tpu.memory_space<smem>>
    %c35 = arith.constant 35 : index
    %35 = memref.load %arg1[%c35] : memref<211xf32, #tpu.memory_space<smem>>
    %c36 = arith.constant 36 : index
    %36 = memref.load %arg1[%c36] : memref<211xf32, #tpu.memory_space<smem>>
    %c37 = arith.constant 37 : index
    %37 = memref.load %arg1[%c37] : memref<211xf32, #tpu.memory_space<smem>>
    %c38 = arith.constant 38 : index
    %38 = memref.load %arg1[%c38] : memref<211xf32, #tpu.memory_space<smem>>
    %c39 = arith.constant 39 : index
    %39 = memref.load %arg1[%c39] : memref<211xf32, #tpu.memory_space<smem>>
    %c40 = arith.constant 40 : index
    %40 = memref.load %arg1[%c40] : memref<211xf32, #tpu.memory_space<smem>>
    %c41 = arith.constant 41 : index
    %41 = memref.load %arg1[%c41] : memref<211xf32, #tpu.memory_space<smem>>
    %c42 = arith.constant 42 : index
    %42 = memref.load %arg1[%c42] : memref<211xf32, #tpu.memory_space<smem>>
    %c43 = arith.constant 43 : index
    %43 = memref.load %arg1[%c43] : memref<211xf32, #tpu.memory_space<smem>>
    %c44 = arith.constant 44 : index
    %44 = memref.load %arg1[%c44] : memref<211xf32, #tpu.memory_space<smem>>
    %c45 = arith.constant 45 : index
    %45 = memref.load %arg1[%c45] : memref<211xf32, #tpu.memory_space<smem>>
    %c46 = arith.constant 46 : index
    %46 = memref.load %arg1[%c46] : memref<211xf32, #tpu.memory_space<smem>>
    %c47 = arith.constant 47 : index
    %47 = memref.load %arg1[%c47] : memref<211xf32, #tpu.memory_space<smem>>
    %c48 = arith.constant 48 : index
    %48 = memref.load %arg1[%c48] : memref<211xf32, #tpu.memory_space<smem>>
    %c49 = arith.constant 49 : index
    %49 = memref.load %arg1[%c49] : memref<211xf32, #tpu.memory_space<smem>>
    %c50 = arith.constant 50 : index
    %50 = memref.load %arg1[%c50] : memref<211xf32, #tpu.memory_space<smem>>
    %c51 = arith.constant 51 : index
    %51 = memref.load %arg1[%c51] : memref<211xf32, #tpu.memory_space<smem>>
    %c52 = arith.constant 52 : index
    %52 = memref.load %arg1[%c52] : memref<211xf32, #tpu.memory_space<smem>>
    %c53 = arith.constant 53 : index
    %53 = memref.load %arg1[%c53] : memref<211xf32, #tpu.memory_space<smem>>
    %c54 = arith.constant 54 : index
    %54 = memref.load %arg1[%c54] : memref<211xf32, #tpu.memory_space<smem>>
    %c55 = arith.constant 55 : index
    %55 = memref.load %arg1[%c55] : memref<211xf32, #tpu.memory_space<smem>>
    %c56 = arith.constant 56 : index
    %56 = memref.load %arg1[%c56] : memref<211xf32, #tpu.memory_space<smem>>
    %c57 = arith.constant 57 : index
    %57 = memref.load %arg1[%c57] : memref<211xf32, #tpu.memory_space<smem>>
    %c58 = arith.constant 58 : index
    %58 = memref.load %arg1[%c58] : memref<211xf32, #tpu.memory_space<smem>>
    %c59 = arith.constant 59 : index
    %59 = memref.load %arg1[%c59] : memref<211xf32, #tpu.memory_space<smem>>
    %c60 = arith.constant 60 : index
    %60 = memref.load %arg1[%c60] : memref<211xf32, #tpu.memory_space<smem>>
    %c61 = arith.constant 61 : index
    %61 = memref.load %arg1[%c61] : memref<211xf32, #tpu.memory_space<smem>>
    %c62 = arith.constant 62 : index
    %62 = memref.load %arg1[%c62] : memref<211xf32, #tpu.memory_space<smem>>
    %c63 = arith.constant 63 : index
    %63 = memref.load %arg1[%c63] : memref<211xf32, #tpu.memory_space<smem>>
    %c64 = arith.constant 64 : index
    %64 = memref.load %arg1[%c64] : memref<211xf32, #tpu.memory_space<smem>>
    %c65 = arith.constant 65 : index
    %65 = memref.load %arg1[%c65] : memref<211xf32, #tpu.memory_space<smem>>
    %c66 = arith.constant 66 : index
    %66 = memref.load %arg1[%c66] : memref<211xf32, #tpu.memory_space<smem>>
    %c67 = arith.constant 67 : index
    %67 = memref.load %arg1[%c67] : memref<211xf32, #tpu.memory_space<smem>>
    %c68 = arith.constant 68 : index
    %68 = memref.load %arg1[%c68] : memref<211xf32, #tpu.memory_space<smem>>
    %c69 = arith.constant 69 : index
    %69 = memref.load %arg1[%c69] : memref<211xf32, #tpu.memory_space<smem>>
    %c70 = arith.constant 70 : index
    %70 = memref.load %arg1[%c70] : memref<211xf32, #tpu.memory_space<smem>>
    %c71 = arith.constant 71 : index
    %71 = memref.load %arg1[%c71] : memref<211xf32, #tpu.memory_space<smem>>
    %c72 = arith.constant 72 : index
    %72 = memref.load %arg1[%c72] : memref<211xf32, #tpu.memory_space<smem>>
    %c73 = arith.constant 73 : index
    %73 = memref.load %arg1[%c73] : memref<211xf32, #tpu.memory_space<smem>>
    %c74 = arith.constant 74 : index
    %74 = memref.load %arg1[%c74] : memref<211xf32, #tpu.memory_space<smem>>
    %c75 = arith.constant 75 : index
    %75 = memref.load %arg1[%c75] : memref<211xf32, #tpu.memory_space<smem>>
    %c76 = arith.constant 76 : index
    %76 = memref.load %arg1[%c76] : memref<211xf32, #tpu.memory_space<smem>>
    %c77 = arith.constant 77 : index
    %77 = memref.load %arg1[%c77] : memref<211xf32, #tpu.memory_space<smem>>
    %c78 = arith.constant 78 : index
    %78 = memref.load %arg1[%c78] : memref<211xf32, #tpu.memory_space<smem>>
    %c79 = arith.constant 79 : index
    %79 = memref.load %arg1[%c79] : memref<211xf32, #tpu.memory_space<smem>>
    %c80 = arith.constant 80 : index
    %80 = memref.load %arg1[%c80] : memref<211xf32, #tpu.memory_space<smem>>
    %c81 = arith.constant 81 : index
    %81 = memref.load %arg1[%c81] : memref<211xf32, #tpu.memory_space<smem>>
    %c82 = arith.constant 82 : index
    %82 = memref.load %arg1[%c82] : memref<211xf32, #tpu.memory_space<smem>>
    %c83 = arith.constant 83 : index
    %83 = memref.load %arg1[%c83] : memref<211xf32, #tpu.memory_space<smem>>
    %c84 = arith.constant 84 : index
    %84 = memref.load %arg1[%c84] : memref<211xf32, #tpu.memory_space<smem>>
    %c85 = arith.constant 85 : index
    %85 = memref.load %arg1[%c85] : memref<211xf32, #tpu.memory_space<smem>>
    %c86 = arith.constant 86 : index
    %86 = memref.load %arg1[%c86] : memref<211xf32, #tpu.memory_space<smem>>
    %c87 = arith.constant 87 : index
    %87 = memref.load %arg1[%c87] : memref<211xf32, #tpu.memory_space<smem>>
    %c88 = arith.constant 88 : index
    %88 = memref.load %arg1[%c88] : memref<211xf32, #tpu.memory_space<smem>>
    %c89 = arith.constant 89 : index
    %89 = memref.load %arg1[%c89] : memref<211xf32, #tpu.memory_space<smem>>
    %c90 = arith.constant 90 : index
    %90 = memref.load %arg1[%c90] : memref<211xf32, #tpu.memory_space<smem>>
    %c91 = arith.constant 91 : index
    %91 = memref.load %arg1[%c91] : memref<211xf32, #tpu.memory_space<smem>>
    %c92 = arith.constant 92 : index
    %92 = memref.load %arg1[%c92] : memref<211xf32, #tpu.memory_space<smem>>
    %c93 = arith.constant 93 : index
    %93 = memref.load %arg1[%c93] : memref<211xf32, #tpu.memory_space<smem>>
    %c94 = arith.constant 94 : index
    %94 = memref.load %arg1[%c94] : memref<211xf32, #tpu.memory_space<smem>>
    %c95 = arith.constant 95 : index
    %95 = memref.load %arg1[%c95] : memref<211xf32, #tpu.memory_space<smem>>
    %c96 = arith.constant 96 : index
    %96 = memref.load %arg1[%c96] : memref<211xf32, #tpu.memory_space<smem>>
    %c97 = arith.constant 97 : index
    %97 = memref.load %arg1[%c97] : memref<211xf32, #tpu.memory_space<smem>>
    %c98 = arith.constant 98 : index
    %98 = memref.load %arg1[%c98] : memref<211xf32, #tpu.memory_space<smem>>
    %c99 = arith.constant 99 : index
    %99 = memref.load %arg1[%c99] : memref<211xf32, #tpu.memory_space<smem>>
    %c100 = arith.constant 100 : index
    %100 = memref.load %arg1[%c100] : memref<211xf32, #tpu.memory_space<smem>>
    %c101 = arith.constant 101 : index
    %101 = memref.load %arg1[%c101] : memref<211xf32, #tpu.memory_space<smem>>
    %c102 = arith.constant 102 : index
    %102 = memref.load %arg1[%c102] : memref<211xf32, #tpu.memory_space<smem>>
    %c103 = arith.constant 103 : index
    %103 = memref.load %arg1[%c103] : memref<211xf32, #tpu.memory_space<smem>>
    %c104 = arith.constant 104 : index
    %104 = memref.load %arg1[%c104] : memref<211xf32, #tpu.memory_space<smem>>
    %c105 = arith.constant 105 : index
    %105 = memref.load %arg1[%c105] : memref<211xf32, #tpu.memory_space<smem>>
    %c106 = arith.constant 106 : index
    %106 = memref.load %arg1[%c106] : memref<211xf32, #tpu.memory_space<smem>>
    %c107 = arith.constant 107 : index
    %107 = memref.load %arg1[%c107] : memref<211xf32, #tpu.memory_space<smem>>
    %c108 = arith.constant 108 : index
    %108 = memref.load %arg1[%c108] : memref<211xf32, #tpu.memory_space<smem>>
    %c109 = arith.constant 109 : index
    %109 = memref.load %arg1[%c109] : memref<211xf32, #tpu.memory_space<smem>>
    %c110 = arith.constant 110 : index
    %110 = memref.load %arg1[%c110] : memref<211xf32, #tpu.memory_space<smem>>
    %c111 = arith.constant 111 : index
    %111 = memref.load %arg1[%c111] : memref<211xf32, #tpu.memory_space<smem>>
    %c112 = arith.constant 112 : index
    %112 = memref.load %arg1[%c112] : memref<211xf32, #tpu.memory_space<smem>>
    %c113 = arith.constant 113 : index
    %113 = memref.load %arg1[%c113] : memref<211xf32, #tpu.memory_space<smem>>
    %c114 = arith.constant 114 : index
    %114 = memref.load %arg1[%c114] : memref<211xf32, #tpu.memory_space<smem>>
    %c115 = arith.constant 115 : index
    %115 = memref.load %arg1[%c115] : memref<211xf32, #tpu.memory_space<smem>>
    %c116 = arith.constant 116 : index
    %116 = memref.load %arg1[%c116] : memref<211xf32, #tpu.memory_space<smem>>
    %c117 = arith.constant 117 : index
    %117 = memref.load %arg1[%c117] : memref<211xf32, #tpu.memory_space<smem>>
    %c118 = arith.constant 118 : index
    %118 = memref.load %arg1[%c118] : memref<211xf32, #tpu.memory_space<smem>>
    %c119 = arith.constant 119 : index
    %119 = memref.load %arg1[%c119] : memref<211xf32, #tpu.memory_space<smem>>
    %c120 = arith.constant 120 : index
    %120 = memref.load %arg1[%c120] : memref<211xf32, #tpu.memory_space<smem>>
    %c121 = arith.constant 121 : index
    %121 = memref.load %arg1[%c121] : memref<211xf32, #tpu.memory_space<smem>>
    %c122 = arith.constant 122 : index
    %122 = memref.load %arg1[%c122] : memref<211xf32, #tpu.memory_space<smem>>
    %c123 = arith.constant 123 : index
    %123 = memref.load %arg1[%c123] : memref<211xf32, #tpu.memory_space<smem>>
    %c124 = arith.constant 124 : index
    %124 = memref.load %arg1[%c124] : memref<211xf32, #tpu.memory_space<smem>>
    %c125 = arith.constant 125 : index
    %125 = memref.load %arg1[%c125] : memref<211xf32, #tpu.memory_space<smem>>
    %c126 = arith.constant 126 : index
    %126 = memref.load %arg1[%c126] : memref<211xf32, #tpu.memory_space<smem>>
    %c127 = arith.constant 127 : index
    %127 = memref.load %arg1[%c127] : memref<211xf32, #tpu.memory_space<smem>>
    %c128 = arith.constant 128 : index
    %128 = memref.load %arg1[%c128] : memref<211xf32, #tpu.memory_space<smem>>
    %c129 = arith.constant 129 : index
    %129 = memref.load %arg1[%c129] : memref<211xf32, #tpu.memory_space<smem>>
    %c130 = arith.constant 130 : index
    %130 = memref.load %arg1[%c130] : memref<211xf32, #tpu.memory_space<smem>>
    %c131 = arith.constant 131 : index
    %131 = memref.load %arg1[%c131] : memref<211xf32, #tpu.memory_space<smem>>
    %c132 = arith.constant 132 : index
    %132 = memref.load %arg1[%c132] : memref<211xf32, #tpu.memory_space<smem>>
    %c133 = arith.constant 133 : index
    %133 = memref.load %arg1[%c133] : memref<211xf32, #tpu.memory_space<smem>>
    %c134 = arith.constant 134 : index
    %134 = memref.load %arg1[%c134] : memref<211xf32, #tpu.memory_space<smem>>
    %c135 = arith.constant 135 : index
    %135 = memref.load %arg1[%c135] : memref<211xf32, #tpu.memory_space<smem>>
    %c136 = arith.constant 136 : index
    %136 = memref.load %arg1[%c136] : memref<211xf32, #tpu.memory_space<smem>>
    %c137 = arith.constant 137 : index
    %137 = memref.load %arg1[%c137] : memref<211xf32, #tpu.memory_space<smem>>
    %c138 = arith.constant 138 : index
    %138 = memref.load %arg1[%c138] : memref<211xf32, #tpu.memory_space<smem>>
    %c139 = arith.constant 139 : index
    %139 = memref.load %arg1[%c139] : memref<211xf32, #tpu.memory_space<smem>>
    %c140 = arith.constant 140 : index
    %140 = memref.load %arg1[%c140] : memref<211xf32, #tpu.memory_space<smem>>
    %c141 = arith.constant 141 : index
    %141 = memref.load %arg1[%c141] : memref<211xf32, #tpu.memory_space<smem>>
    %c142 = arith.constant 142 : index
    %142 = memref.load %arg1[%c142] : memref<211xf32, #tpu.memory_space<smem>>
    %c143 = arith.constant 143 : index
    %143 = memref.load %arg1[%c143] : memref<211xf32, #tpu.memory_space<smem>>
    %c144 = arith.constant 144 : index
    %144 = memref.load %arg1[%c144] : memref<211xf32, #tpu.memory_space<smem>>
    %c145 = arith.constant 145 : index
    %145 = memref.load %arg1[%c145] : memref<211xf32, #tpu.memory_space<smem>>
    %c146 = arith.constant 146 : index
    %146 = memref.load %arg1[%c146] : memref<211xf32, #tpu.memory_space<smem>>
    %c147 = arith.constant 147 : index
    %147 = memref.load %arg1[%c147] : memref<211xf32, #tpu.memory_space<smem>>
    %c148 = arith.constant 148 : index
    %148 = memref.load %arg1[%c148] : memref<211xf32, #tpu.memory_space<smem>>
    %c149 = arith.constant 149 : index
    %149 = memref.load %arg1[%c149] : memref<211xf32, #tpu.memory_space<smem>>
    %c150 = arith.constant 150 : index
    %150 = memref.load %arg1[%c150] : memref<211xf32, #tpu.memory_space<smem>>
    %c151 = arith.constant 151 : index
    %151 = memref.load %arg1[%c151] : memref<211xf32, #tpu.memory_space<smem>>
    %c152 = arith.constant 152 : index
    %152 = memref.load %arg1[%c152] : memref<211xf32, #tpu.memory_space<smem>>
    %c153 = arith.constant 153 : index
    %153 = memref.load %arg1[%c153] : memref<211xf32, #tpu.memory_space<smem>>
    %c154 = arith.constant 154 : index
    %154 = memref.load %arg1[%c154] : memref<211xf32, #tpu.memory_space<smem>>
    %c155 = arith.constant 155 : index
    %155 = memref.load %arg1[%c155] : memref<211xf32, #tpu.memory_space<smem>>
    %c156 = arith.constant 156 : index
    %156 = memref.load %arg1[%c156] : memref<211xf32, #tpu.memory_space<smem>>
    %c157 = arith.constant 157 : index
    %157 = memref.load %arg1[%c157] : memref<211xf32, #tpu.memory_space<smem>>
    %c158 = arith.constant 158 : index
    %158 = memref.load %arg1[%c158] : memref<211xf32, #tpu.memory_space<smem>>
    %c159 = arith.constant 159 : index
    %159 = memref.load %arg1[%c159] : memref<211xf32, #tpu.memory_space<smem>>
    %c160 = arith.constant 160 : index
    %160 = memref.load %arg1[%c160] : memref<211xf32, #tpu.memory_space<smem>>
    %c161 = arith.constant 161 : index
    %161 = memref.load %arg1[%c161] : memref<211xf32, #tpu.memory_space<smem>>
    %c162 = arith.constant 162 : index
    %162 = memref.load %arg1[%c162] : memref<211xf32, #tpu.memory_space<smem>>
    %c163 = arith.constant 163 : index
    %163 = memref.load %arg1[%c163] : memref<211xf32, #tpu.memory_space<smem>>
    %c164 = arith.constant 164 : index
    %164 = memref.load %arg1[%c164] : memref<211xf32, #tpu.memory_space<smem>>
    %c165 = arith.constant 165 : index
    %165 = memref.load %arg1[%c165] : memref<211xf32, #tpu.memory_space<smem>>
    %c166 = arith.constant 166 : index
    %166 = memref.load %arg1[%c166] : memref<211xf32, #tpu.memory_space<smem>>
    %c167 = arith.constant 167 : index
    %167 = memref.load %arg1[%c167] : memref<211xf32, #tpu.memory_space<smem>>
    %c168 = arith.constant 168 : index
    %168 = memref.load %arg1[%c168] : memref<211xf32, #tpu.memory_space<smem>>
    %c169 = arith.constant 169 : index
    %169 = memref.load %arg1[%c169] : memref<211xf32, #tpu.memory_space<smem>>
    %c170 = arith.constant 170 : index
    %170 = memref.load %arg1[%c170] : memref<211xf32, #tpu.memory_space<smem>>
    %c171 = arith.constant 171 : index
    %171 = memref.load %arg1[%c171] : memref<211xf32, #tpu.memory_space<smem>>
    %c172 = arith.constant 172 : index
    %172 = memref.load %arg1[%c172] : memref<211xf32, #tpu.memory_space<smem>>
    %c173 = arith.constant 173 : index
    %173 = memref.load %arg1[%c173] : memref<211xf32, #tpu.memory_space<smem>>
    %c174 = arith.constant 174 : index
    %174 = memref.load %arg1[%c174] : memref<211xf32, #tpu.memory_space<smem>>
    %c175 = arith.constant 175 : index
    %175 = memref.load %arg1[%c175] : memref<211xf32, #tpu.memory_space<smem>>
    %c176 = arith.constant 176 : index
    %176 = memref.load %arg1[%c176] : memref<211xf32, #tpu.memory_space<smem>>
    %c177 = arith.constant 177 : index
    %177 = memref.load %arg1[%c177] : memref<211xf32, #tpu.memory_space<smem>>
    %c178 = arith.constant 178 : index
    %178 = memref.load %arg1[%c178] : memref<211xf32, #tpu.memory_space<smem>>
    %c179 = arith.constant 179 : index
    %179 = memref.load %arg1[%c179] : memref<211xf32, #tpu.memory_space<smem>>
    %c180 = arith.constant 180 : index
    %180 = memref.load %arg1[%c180] : memref<211xf32, #tpu.memory_space<smem>>
    %c181 = arith.constant 181 : index
    %181 = memref.load %arg1[%c181] : memref<211xf32, #tpu.memory_space<smem>>
    %c182 = arith.constant 182 : index
    %182 = memref.load %arg1[%c182] : memref<211xf32, #tpu.memory_space<smem>>
    %c183 = arith.constant 183 : index
    %183 = memref.load %arg1[%c183] : memref<211xf32, #tpu.memory_space<smem>>
    %c184 = arith.constant 184 : index
    %184 = memref.load %arg1[%c184] : memref<211xf32, #tpu.memory_space<smem>>
    %c185 = arith.constant 185 : index
    %185 = memref.load %arg1[%c185] : memref<211xf32, #tpu.memory_space<smem>>
    %c186 = arith.constant 186 : index
    %186 = memref.load %arg1[%c186] : memref<211xf32, #tpu.memory_space<smem>>
    %c187 = arith.constant 187 : index
    %187 = memref.load %arg1[%c187] : memref<211xf32, #tpu.memory_space<smem>>
    %c188 = arith.constant 188 : index
    %188 = memref.load %arg1[%c188] : memref<211xf32, #tpu.memory_space<smem>>
    %c189 = arith.constant 189 : index
    %189 = memref.load %arg1[%c189] : memref<211xf32, #tpu.memory_space<smem>>
    %c190 = arith.constant 190 : index
    %190 = memref.load %arg1[%c190] : memref<211xf32, #tpu.memory_space<smem>>
    %c191 = arith.constant 191 : index
    %191 = memref.load %arg1[%c191] : memref<211xf32, #tpu.memory_space<smem>>
    %c192 = arith.constant 192 : index
    %192 = memref.load %arg1[%c192] : memref<211xf32, #tpu.memory_space<smem>>
    %c193 = arith.constant 193 : index
    %193 = memref.load %arg1[%c193] : memref<211xf32, #tpu.memory_space<smem>>
    %c194 = arith.constant 194 : index
    %194 = memref.load %arg1[%c194] : memref<211xf32, #tpu.memory_space<smem>>
    %c195 = arith.constant 195 : index
    %195 = memref.load %arg1[%c195] : memref<211xf32, #tpu.memory_space<smem>>
    %c196 = arith.constant 196 : index
    %196 = memref.load %arg1[%c196] : memref<211xf32, #tpu.memory_space<smem>>
    %c197 = arith.constant 197 : index
    %197 = memref.load %arg1[%c197] : memref<211xf32, #tpu.memory_space<smem>>
    %c198 = arith.constant 198 : index
    %198 = memref.load %arg1[%c198] : memref<211xf32, #tpu.memory_space<smem>>
    %c199 = arith.constant 199 : index
    %199 = memref.load %arg1[%c199] : memref<211xf32, #tpu.memory_space<smem>>
    %c200 = arith.constant 200 : index
    %200 = memref.load %arg1[%c200] : memref<211xf32, #tpu.memory_space<smem>>
    %c201 = arith.constant 201 : index
    %201 = memref.load %arg1[%c201] : memref<211xf32, #tpu.memory_space<smem>>
    %c202 = arith.constant 202 : index
    %202 = memref.load %arg1[%c202] : memref<211xf32, #tpu.memory_space<smem>>
    %c203 = arith.constant 203 : index
    %203 = memref.load %arg1[%c203] : memref<211xf32, #tpu.memory_space<smem>>
    %c204 = arith.constant 204 : index
    %204 = memref.load %arg1[%c204] : memref<211xf32, #tpu.memory_space<smem>>
    %c205 = arith.constant 205 : index
    %205 = memref.load %arg1[%c205] : memref<211xf32, #tpu.memory_space<smem>>
    %c206 = arith.constant 206 : index
    %206 = memref.load %arg1[%c206] : memref<211xf32, #tpu.memory_space<smem>>
    %c207 = arith.constant 207 : index
    %207 = memref.load %arg1[%c207] : memref<211xf32, #tpu.memory_space<smem>>
    %c208 = arith.constant 208 : index
    %208 = memref.load %arg1[%c208] : memref<211xf32, #tpu.memory_space<smem>>
    %c209 = arith.constant 209 : index
    %209 = memref.load %arg1[%c209] : memref<211xf32, #tpu.memory_space<smem>>
    %c210 = arith.constant 210 : index
    %210 = memref.load %arg1[%c210] : memref<211xf32, #tpu.memory_space<smem>>
    %c0_0 = arith.constant 0 : index
    %c0_1 = arith.constant 0 : index
    %c0_2 = arith.constant 0 : index
    %211 = vector.load %arg2[%c0_0, %c0_1, %c0_2] : memref<4x8x128xf32, #tpu.memory_space<vmem>>, vector<1x8x128xf32>
    %212 = vector.shape_cast %211 : vector<1x8x128xf32> to vector<8x128xf32>
    %c1_3 = arith.constant 1 : index
    %c0_4 = arith.constant 0 : index
    %c0_5 = arith.constant 0 : index
    %213 = vector.load %arg2[%c1_3, %c0_4, %c0_5] : memref<4x8x128xf32, #tpu.memory_space<vmem>>, vector<1x8x128xf32>
    %214 = vector.shape_cast %213 : vector<1x8x128xf32> to vector<8x128xf32>
    %c2_6 = arith.constant 2 : index
    %c0_7 = arith.constant 0 : index
    %c0_8 = arith.constant 0 : index
    %215 = vector.load %arg2[%c2_6, %c0_7, %c0_8] : memref<4x8x128xf32, #tpu.memory_space<vmem>>, vector<1x8x128xf32>
    %216 = vector.shape_cast %215 : vector<1x8x128xf32> to vector<8x128xf32>
    %c3_9 = arith.constant 3 : index
    %c0_10 = arith.constant 0 : index
    %c0_11 = arith.constant 0 : index
    %217 = vector.load %arg2[%c3_9, %c0_10, %c0_11] : memref<4x8x128xf32, #tpu.memory_space<vmem>>, vector<1x8x128xf32>
    %218 = vector.shape_cast %217 : vector<1x8x128xf32> to vector<8x128xf32>
    %219 = vector.broadcast %0 : f32 to vector<8x128xf32>
    %220 = arith.mulf %212, %219 : vector<8x128xf32>
    %221 = vector.broadcast %1 : f32 to vector<8x128xf32>
    %222 = arith.mulf %214, %221 : vector<8x128xf32>
    %223 = arith.addf %220, %222 : vector<8x128xf32>
    %224 = vector.broadcast %2 : f32 to vector<8x128xf32>
    %225 = arith.mulf %216, %224 : vector<8x128xf32>
    %226 = arith.addf %223, %225 : vector<8x128xf32>
    %227 = vector.broadcast %3 : f32 to vector<8x128xf32>
    %228 = arith.mulf %218, %227 : vector<8x128xf32>
    %229 = arith.addf %226, %228 : vector<8x128xf32>
    %230 = vector.broadcast %32 : f32 to vector<8x128xf32>
    %231 = arith.addf %229, %230 : vector<8x128xf32>
    %cst = arith.constant 0.00999999977 : f32
    %232 = vector.broadcast %cst : f32 to vector<8x128xf32>
    %233 = arith.mulf %232, %231 : vector<8x128xf32>
    %234 = arith.maximumf %231, %233 : vector<8x128xf32>
    %235 = vector.broadcast %4 : f32 to vector<8x128xf32>
    %236 = arith.mulf %212, %235 : vector<8x128xf32>
    %237 = vector.broadcast %5 : f32 to vector<8x128xf32>
    %238 = arith.mulf %214, %237 : vector<8x128xf32>
    %239 = arith.addf %236, %238 : vector<8x128xf32>
    %240 = vector.broadcast %6 : f32 to vector<8x128xf32>
    %241 = arith.mulf %216, %240 : vector<8x128xf32>
    %242 = arith.addf %239, %241 : vector<8x128xf32>
    %243 = vector.broadcast %7 : f32 to vector<8x128xf32>
    %244 = arith.mulf %218, %243 : vector<8x128xf32>
    %245 = arith.addf %242, %244 : vector<8x128xf32>
    %246 = vector.broadcast %33 : f32 to vector<8x128xf32>
    %247 = arith.addf %245, %246 : vector<8x128xf32>
    %cst_12 = arith.constant 0.00999999977 : f32
    %248 = vector.broadcast %cst_12 : f32 to vector<8x128xf32>
    %249 = arith.mulf %248, %247 : vector<8x128xf32>
    %250 = arith.maximumf %247, %249 : vector<8x128xf32>
    %251 = vector.broadcast %8 : f32 to vector<8x128xf32>
    %252 = arith.mulf %212, %251 : vector<8x128xf32>
    %253 = vector.broadcast %9 : f32 to vector<8x128xf32>
    %254 = arith.mulf %214, %253 : vector<8x128xf32>
    %255 = arith.addf %252, %254 : vector<8x128xf32>
    %256 = vector.broadcast %10 : f32 to vector<8x128xf32>
    %257 = arith.mulf %216, %256 : vector<8x128xf32>
    %258 = arith.addf %255, %257 : vector<8x128xf32>
    %259 = vector.broadcast %11 : f32 to vector<8x128xf32>
    %260 = arith.mulf %218, %259 : vector<8x128xf32>
    %261 = arith.addf %258, %260 : vector<8x128xf32>
    %262 = vector.broadcast %34 : f32 to vector<8x128xf32>
    %263 = arith.addf %261, %262 : vector<8x128xf32>
    %cst_13 = arith.constant 0.00999999977 : f32
    %264 = vector.broadcast %cst_13 : f32 to vector<8x128xf32>
    %265 = arith.mulf %264, %263 : vector<8x128xf32>
    %266 = arith.maximumf %263, %265 : vector<8x128xf32>
    %267 = vector.broadcast %12 : f32 to vector<8x128xf32>
    %268 = arith.mulf %212, %267 : vector<8x128xf32>
    %269 = vector.broadcast %13 : f32 to vector<8x128xf32>
    %270 = arith.mulf %214, %269 : vector<8x128xf32>
    %271 = arith.addf %268, %270 : vector<8x128xf32>
    %272 = vector.broadcast %14 : f32 to vector<8x128xf32>
    %273 = arith.mulf %216, %272 : vector<8x128xf32>
    %274 = arith.addf %271, %273 : vector<8x128xf32>
    %275 = vector.broadcast %15 : f32 to vector<8x128xf32>
    %276 = arith.mulf %218, %275 : vector<8x128xf32>
    %277 = arith.addf %274, %276 : vector<8x128xf32>
    %278 = vector.broadcast %35 : f32 to vector<8x128xf32>
    %279 = arith.addf %277, %278 : vector<8x128xf32>
    %cst_14 = arith.constant 0.00999999977 : f32
    %280 = vector.broadcast %cst_14 : f32 to vector<8x128xf32>
    %281 = arith.mulf %280, %279 : vector<8x128xf32>
    %282 = arith.maximumf %279, %281 : vector<8x128xf32>
    %283 = vector.broadcast %16 : f32 to vector<8x128xf32>
    %284 = arith.mulf %212, %283 : vector<8x128xf32>
    %285 = vector.broadcast %17 : f32 to vector<8x128xf32>
    %286 = arith.mulf %214, %285 : vector<8x128xf32>
    %287 = arith.addf %284, %286 : vector<8x128xf32>
    %288 = vector.broadcast %18 : f32 to vector<8x128xf32>
    %289 = arith.mulf %216, %288 : vector<8x128xf32>
    %290 = arith.addf %287, %289 : vector<8x128xf32>
    %291 = vector.broadcast %19 : f32 to vector<8x128xf32>
    %292 = arith.mulf %218, %291 : vector<8x128xf32>
    %293 = arith.addf %290, %292 : vector<8x128xf32>
    %294 = vector.broadcast %36 : f32 to vector<8x128xf32>
    %295 = arith.addf %293, %294 : vector<8x128xf32>
    %cst_15 = arith.constant 0.00999999977 : f32
    %296 = vector.broadcast %cst_15 : f32 to vector<8x128xf32>
    %297 = arith.mulf %296, %295 : vector<8x128xf32>
    %298 = arith.maximumf %295, %297 : vector<8x128xf32>
    %299 = vector.broadcast %20 : f32 to vector<8x128xf32>
    %300 = arith.mulf %212, %299 : vector<8x128xf32>
    %301 = vector.broadcast %21 : f32 to vector<8x128xf32>
    %302 = arith.mulf %214, %301 : vector<8x128xf32>
    %303 = arith.addf %300, %302 : vector<8x128xf32>
    %304 = vector.broadcast %22 : f32 to vector<8x128xf32>
    %305 = arith.mulf %216, %304 : vector<8x128xf32>
    %306 = arith.addf %303, %305 : vector<8x128xf32>
    %307 = vector.broadcast %23 : f32 to vector<8x128xf32>
    %308 = arith.mulf %218, %307 : vector<8x128xf32>
    %309 = arith.addf %306, %308 : vector<8x128xf32>
    %310 = vector.broadcast %37 : f32 to vector<8x128xf32>
    %311 = arith.addf %309, %310 : vector<8x128xf32>
    %cst_16 = arith.constant 0.00999999977 : f32
    %312 = vector.broadcast %cst_16 : f32 to vector<8x128xf32>
    %313 = arith.mulf %312, %311 : vector<8x128xf32>
    %314 = arith.maximumf %311, %313 : vector<8x128xf32>
    %315 = vector.broadcast %24 : f32 to vector<8x128xf32>
    %316 = arith.mulf %212, %315 : vector<8x128xf32>
    %317 = vector.broadcast %25 : f32 to vector<8x128xf32>
    %318 = arith.mulf %214, %317 : vector<8x128xf32>
    %319 = arith.addf %316, %318 : vector<8x128xf32>
    %320 = vector.broadcast %26 : f32 to vector<8x128xf32>
    %321 = arith.mulf %216, %320 : vector<8x128xf32>
    %322 = arith.addf %319, %321 : vector<8x128xf32>
    %323 = vector.broadcast %27 : f32 to vector<8x128xf32>
    %324 = arith.mulf %218, %323 : vector<8x128xf32>
    %325 = arith.addf %322, %324 : vector<8x128xf32>
    %326 = vector.broadcast %38 : f32 to vector<8x128xf32>
    %327 = arith.addf %325, %326 : vector<8x128xf32>
    %cst_17 = arith.constant 0.00999999977 : f32
    %328 = vector.broadcast %cst_17 : f32 to vector<8x128xf32>
    %329 = arith.mulf %328, %327 : vector<8x128xf32>
    %330 = arith.maximumf %327, %329 : vector<8x128xf32>
    %331 = vector.broadcast %28 : f32 to vector<8x128xf32>
    %332 = arith.mulf %212, %331 : vector<8x128xf32>
    %333 = vector.broadcast %29 : f32 to vector<8x128xf32>
    %334 = arith.mulf %214, %333 : vector<8x128xf32>
    %335 = arith.addf %332, %334 : vector<8x128xf32>
    %336 = vector.broadcast %30 : f32 to vector<8x128xf32>
    %337 = arith.mulf %216, %336 : vector<8x128xf32>
    %338 = arith.addf %335, %337 : vector<8x128xf32>
    %339 = vector.broadcast %31 : f32 to vector<8x128xf32>
    %340 = arith.mulf %218, %339 : vector<8x128xf32>
    %341 = arith.addf %338, %340 : vector<8x128xf32>
    %342 = vector.broadcast %39 : f32 to vector<8x128xf32>
    %343 = arith.addf %341, %342 : vector<8x128xf32>
    %cst_18 = arith.constant 0.00999999977 : f32
    %344 = vector.broadcast %cst_18 : f32 to vector<8x128xf32>
    %345 = arith.mulf %344, %343 : vector<8x128xf32>
    %346 = arith.maximumf %343, %345 : vector<8x128xf32>
    %347 = vector.broadcast %40 : f32 to vector<8x128xf32>
    %348 = arith.mulf %234, %347 : vector<8x128xf32>
    %349 = vector.broadcast %41 : f32 to vector<8x128xf32>
    %350 = arith.mulf %250, %349 : vector<8x128xf32>
    %351 = arith.addf %348, %350 : vector<8x128xf32>
    %352 = vector.broadcast %42 : f32 to vector<8x128xf32>
    %353 = arith.mulf %266, %352 : vector<8x128xf32>
    %354 = arith.addf %351, %353 : vector<8x128xf32>
    %355 = vector.broadcast %43 : f32 to vector<8x128xf32>
    %356 = arith.mulf %282, %355 : vector<8x128xf32>
    %357 = arith.addf %354, %356 : vector<8x128xf32>
    %358 = vector.broadcast %44 : f32 to vector<8x128xf32>
    %359 = arith.mulf %298, %358 : vector<8x128xf32>
    %360 = arith.addf %357, %359 : vector<8x128xf32>
    %361 = vector.broadcast %45 : f32 to vector<8x128xf32>
    %362 = arith.mulf %314, %361 : vector<8x128xf32>
    %363 = arith.addf %360, %362 : vector<8x128xf32>
    %364 = vector.broadcast %46 : f32 to vector<8x128xf32>
    %365 = arith.mulf %330, %364 : vector<8x128xf32>
    %366 = arith.addf %363, %365 : vector<8x128xf32>
    %367 = vector.broadcast %47 : f32 to vector<8x128xf32>
    %368 = arith.mulf %346, %367 : vector<8x128xf32>
    %369 = arith.addf %366, %368 : vector<8x128xf32>
    %370 = vector.broadcast %104 : f32 to vector<8x128xf32>
    %371 = arith.addf %369, %370 : vector<8x128xf32>
    %cst_19 = arith.constant 0.00999999977 : f32
    %372 = vector.broadcast %cst_19 : f32 to vector<8x128xf32>
    %373 = arith.mulf %372, %371 : vector<8x128xf32>
    %374 = arith.maximumf %371, %373 : vector<8x128xf32>
    %375 = vector.broadcast %48 : f32 to vector<8x128xf32>
    %376 = arith.mulf %234, %375 : vector<8x128xf32>
    %377 = vector.broadcast %49 : f32 to vector<8x128xf32>
    %378 = arith.mulf %250, %377 : vector<8x128xf32>
    %379 = arith.addf %376, %378 : vector<8x128xf32>
    %380 = vector.broadcast %50 : f32 to vector<8x128xf32>
    %381 = arith.mulf %266, %380 : vector<8x128xf32>
    %382 = arith.addf %379, %381 : vector<8x128xf32>
    %383 = vector.broadcast %51 : f32 to vector<8x128xf32>
    %384 = arith.mulf %282, %383 : vector<8x128xf32>
    %385 = arith.addf %382, %384 : vector<8x128xf32>
    %386 = vector.broadcast %52 : f32 to vector<8x128xf32>
    %387 = arith.mulf %298, %386 : vector<8x128xf32>
    %388 = arith.addf %385, %387 : vector<8x128xf32>
    %389 = vector.broadcast %53 : f32 to vector<8x128xf32>
    %390 = arith.mulf %314, %389 : vector<8x128xf32>
    %391 = arith.addf %388, %390 : vector<8x128xf32>
    %392 = vector.broadcast %54 : f32 to vector<8x128xf32>
    %393 = arith.mulf %330, %392 : vector<8x128xf32>
    %394 = arith.addf %391, %393 : vector<8x128xf32>
    %395 = vector.broadcast %55 : f32 to vector<8x128xf32>
    %396 = arith.mulf %346, %395 : vector<8x128xf32>
    %397 = arith.addf %394, %396 : vector<8x128xf32>
    %398 = vector.broadcast %105 : f32 to vector<8x128xf32>
    %399 = arith.addf %397, %398 : vector<8x128xf32>
    %cst_20 = arith.constant 0.00999999977 : f32
    %400 = vector.broadcast %cst_20 : f32 to vector<8x128xf32>
    %401 = arith.mulf %400, %399 : vector<8x128xf32>
    %402 = arith.maximumf %399, %401 : vector<8x128xf32>
    %403 = vector.broadcast %56 : f32 to vector<8x128xf32>
    %404 = arith.mulf %234, %403 : vector<8x128xf32>
    %405 = vector.broadcast %57 : f32 to vector<8x128xf32>
    %406 = arith.mulf %250, %405 : vector<8x128xf32>
    %407 = arith.addf %404, %406 : vector<8x128xf32>
    %408 = vector.broadcast %58 : f32 to vector<8x128xf32>
    %409 = arith.mulf %266, %408 : vector<8x128xf32>
    %410 = arith.addf %407, %409 : vector<8x128xf32>
    %411 = vector.broadcast %59 : f32 to vector<8x128xf32>
    %412 = arith.mulf %282, %411 : vector<8x128xf32>
    %413 = arith.addf %410, %412 : vector<8x128xf32>
    %414 = vector.broadcast %60 : f32 to vector<8x128xf32>
    %415 = arith.mulf %298, %414 : vector<8x128xf32>
    %416 = arith.addf %413, %415 : vector<8x128xf32>
    %417 = vector.broadcast %61 : f32 to vector<8x128xf32>
    %418 = arith.mulf %314, %417 : vector<8x128xf32>
    %419 = arith.addf %416, %418 : vector<8x128xf32>
    %420 = vector.broadcast %62 : f32 to vector<8x128xf32>
    %421 = arith.mulf %330, %420 : vector<8x128xf32>
    %422 = arith.addf %419, %421 : vector<8x128xf32>
    %423 = vector.broadcast %63 : f32 to vector<8x128xf32>
    %424 = arith.mulf %346, %423 : vector<8x128xf32>
    %425 = arith.addf %422, %424 : vector<8x128xf32>
    %426 = vector.broadcast %106 : f32 to vector<8x128xf32>
    %427 = arith.addf %425, %426 : vector<8x128xf32>
    %cst_21 = arith.constant 0.00999999977 : f32
    %428 = vector.broadcast %cst_21 : f32 to vector<8x128xf32>
    %429 = arith.mulf %428, %427 : vector<8x128xf32>
    %430 = arith.maximumf %427, %429 : vector<8x128xf32>
    %431 = vector.broadcast %64 : f32 to vector<8x128xf32>
    %432 = arith.mulf %234, %431 : vector<8x128xf32>
    %433 = vector.broadcast %65 : f32 to vector<8x128xf32>
    %434 = arith.mulf %250, %433 : vector<8x128xf32>
    %435 = arith.addf %432, %434 : vector<8x128xf32>
    %436 = vector.broadcast %66 : f32 to vector<8x128xf32>
    %437 = arith.mulf %266, %436 : vector<8x128xf32>
    %438 = arith.addf %435, %437 : vector<8x128xf32>
    %439 = vector.broadcast %67 : f32 to vector<8x128xf32>
    %440 = arith.mulf %282, %439 : vector<8x128xf32>
    %441 = arith.addf %438, %440 : vector<8x128xf32>
    %442 = vector.broadcast %68 : f32 to vector<8x128xf32>
    %443 = arith.mulf %298, %442 : vector<8x128xf32>
    %444 = arith.addf %441, %443 : vector<8x128xf32>
    %445 = vector.broadcast %69 : f32 to vector<8x128xf32>
    %446 = arith.mulf %314, %445 : vector<8x128xf32>
    %447 = arith.addf %444, %446 : vector<8x128xf32>
    %448 = vector.broadcast %70 : f32 to vector<8x128xf32>
    %449 = arith.mulf %330, %448 : vector<8x128xf32>
    %450 = arith.addf %447, %449 : vector<8x128xf32>
    %451 = vector.broadcast %71 : f32 to vector<8x128xf32>
    %452 = arith.mulf %346, %451 : vector<8x128xf32>
    %453 = arith.addf %450, %452 : vector<8x128xf32>
    %454 = vector.broadcast %107 : f32 to vector<8x128xf32>
    %455 = arith.addf %453, %454 : vector<8x128xf32>
    %cst_22 = arith.constant 0.00999999977 : f32
    %456 = vector.broadcast %cst_22 : f32 to vector<8x128xf32>
    %457 = arith.mulf %456, %455 : vector<8x128xf32>
    %458 = arith.maximumf %455, %457 : vector<8x128xf32>
    %459 = vector.broadcast %72 : f32 to vector<8x128xf32>
    %460 = arith.mulf %234, %459 : vector<8x128xf32>
    %461 = vector.broadcast %73 : f32 to vector<8x128xf32>
    %462 = arith.mulf %250, %461 : vector<8x128xf32>
    %463 = arith.addf %460, %462 : vector<8x128xf32>
    %464 = vector.broadcast %74 : f32 to vector<8x128xf32>
    %465 = arith.mulf %266, %464 : vector<8x128xf32>
    %466 = arith.addf %463, %465 : vector<8x128xf32>
    %467 = vector.broadcast %75 : f32 to vector<8x128xf32>
    %468 = arith.mulf %282, %467 : vector<8x128xf32>
    %469 = arith.addf %466, %468 : vector<8x128xf32>
    %470 = vector.broadcast %76 : f32 to vector<8x128xf32>
    %471 = arith.mulf %298, %470 : vector<8x128xf32>
    %472 = arith.addf %469, %471 : vector<8x128xf32>
    %473 = vector.broadcast %77 : f32 to vector<8x128xf32>
    %474 = arith.mulf %314, %473 : vector<8x128xf32>
    %475 = arith.addf %472, %474 : vector<8x128xf32>
    %476 = vector.broadcast %78 : f32 to vector<8x128xf32>
    %477 = arith.mulf %330, %476 : vector<8x128xf32>
    %478 = arith.addf %475, %477 : vector<8x128xf32>
    %479 = vector.broadcast %79 : f32 to vector<8x128xf32>
    %480 = arith.mulf %346, %479 : vector<8x128xf32>
    %481 = arith.addf %478, %480 : vector<8x128xf32>
    %482 = vector.broadcast %108 : f32 to vector<8x128xf32>
    %483 = arith.addf %481, %482 : vector<8x128xf32>
    %cst_23 = arith.constant 0.00999999977 : f32
    %484 = vector.broadcast %cst_23 : f32 to vector<8x128xf32>
    %485 = arith.mulf %484, %483 : vector<8x128xf32>
    %486 = arith.maximumf %483, %485 : vector<8x128xf32>
    %487 = vector.broadcast %80 : f32 to vector<8x128xf32>
    %488 = arith.mulf %234, %487 : vector<8x128xf32>
    %489 = vector.broadcast %81 : f32 to vector<8x128xf32>
    %490 = arith.mulf %250, %489 : vector<8x128xf32>
    %491 = arith.addf %488, %490 : vector<8x128xf32>
    %492 = vector.broadcast %82 : f32 to vector<8x128xf32>
    %493 = arith.mulf %266, %492 : vector<8x128xf32>
    %494 = arith.addf %491, %493 : vector<8x128xf32>
    %495 = vector.broadcast %83 : f32 to vector<8x128xf32>
    %496 = arith.mulf %282, %495 : vector<8x128xf32>
    %497 = arith.addf %494, %496 : vector<8x128xf32>
    %498 = vector.broadcast %84 : f32 to vector<8x128xf32>
    %499 = arith.mulf %298, %498 : vector<8x128xf32>
    %500 = arith.addf %497, %499 : vector<8x128xf32>
    %501 = vector.broadcast %85 : f32 to vector<8x128xf32>
    %502 = arith.mulf %314, %501 : vector<8x128xf32>
    %503 = arith.addf %500, %502 : vector<8x128xf32>
    %504 = vector.broadcast %86 : f32 to vector<8x128xf32>
    %505 = arith.mulf %330, %504 : vector<8x128xf32>
    %506 = arith.addf %503, %505 : vector<8x128xf32>
    %507 = vector.broadcast %87 : f32 to vector<8x128xf32>
    %508 = arith.mulf %346, %507 : vector<8x128xf32>
    %509 = arith.addf %506, %508 : vector<8x128xf32>
    %510 = vector.broadcast %109 : f32 to vector<8x128xf32>
    %511 = arith.addf %509, %510 : vector<8x128xf32>
    %cst_24 = arith.constant 0.00999999977 : f32
    %512 = vector.broadcast %cst_24 : f32 to vector<8x128xf32>
    %513 = arith.mulf %512, %511 : vector<8x128xf32>
    %514 = arith.maximumf %511, %513 : vector<8x128xf32>
    %515 = vector.broadcast %88 : f32 to vector<8x128xf32>
    %516 = arith.mulf %234, %515 : vector<8x128xf32>
    %517 = vector.broadcast %89 : f32 to vector<8x128xf32>
    %518 = arith.mulf %250, %517 : vector<8x128xf32>
    %519 = arith.addf %516, %518 : vector<8x128xf32>
    %520 = vector.broadcast %90 : f32 to vector<8x128xf32>
    %521 = arith.mulf %266, %520 : vector<8x128xf32>
    %522 = arith.addf %519, %521 : vector<8x128xf32>
    %523 = vector.broadcast %91 : f32 to vector<8x128xf32>
    %524 = arith.mulf %282, %523 : vector<8x128xf32>
    %525 = arith.addf %522, %524 : vector<8x128xf32>
    %526 = vector.broadcast %92 : f32 to vector<8x128xf32>
    %527 = arith.mulf %298, %526 : vector<8x128xf32>
    %528 = arith.addf %525, %527 : vector<8x128xf32>
    %529 = vector.broadcast %93 : f32 to vector<8x128xf32>
    %530 = arith.mulf %314, %529 : vector<8x128xf32>
    %531 = arith.addf %528, %530 : vector<8x128xf32>
    %532 = vector.broadcast %94 : f32 to vector<8x128xf32>
    %533 = arith.mulf %330, %532 : vector<8x128xf32>
    %534 = arith.addf %531, %533 : vector<8x128xf32>
    %535 = vector.broadcast %95 : f32 to vector<8x128xf32>
    %536 = arith.mulf %346, %535 : vector<8x128xf32>
    %537 = arith.addf %534, %536 : vector<8x128xf32>
    %538 = vector.broadcast %110 : f32 to vector<8x128xf32>
    %539 = arith.addf %537, %538 : vector<8x128xf32>
    %cst_25 = arith.constant 0.00999999977 : f32
    %540 = vector.broadcast %cst_25 : f32 to vector<8x128xf32>
    %541 = arith.mulf %540, %539 : vector<8x128xf32>
    %542 = arith.maximumf %539, %541 : vector<8x128xf32>
    %543 = vector.broadcast %96 : f32 to vector<8x128xf32>
    %544 = arith.mulf %234, %543 : vector<8x128xf32>
    %545 = vector.broadcast %97 : f32 to vector<8x128xf32>
    %546 = arith.mulf %250, %545 : vector<8x128xf32>
    %547 = arith.addf %544, %546 : vector<8x128xf32>
    %548 = vector.broadcast %98 : f32 to vector<8x128xf32>
    %549 = arith.mulf %266, %548 : vector<8x128xf32>
    %550 = arith.addf %547, %549 : vector<8x128xf32>
    %551 = vector.broadcast %99 : f32 to vector<8x128xf32>
    %552 = arith.mulf %282, %551 : vector<8x128xf32>
    %553 = arith.addf %550, %552 : vector<8x128xf32>
    %554 = vector.broadcast %100 : f32 to vector<8x128xf32>
    %555 = arith.mulf %298, %554 : vector<8x128xf32>
    %556 = arith.addf %553, %555 : vector<8x128xf32>
    %557 = vector.broadcast %101 : f32 to vector<8x128xf32>
    %558 = arith.mulf %314, %557 : vector<8x128xf32>
    %559 = arith.addf %556, %558 : vector<8x128xf32>
    %560 = vector.broadcast %102 : f32 to vector<8x128xf32>
    %561 = arith.mulf %330, %560 : vector<8x128xf32>
    %562 = arith.addf %559, %561 : vector<8x128xf32>
    %563 = vector.broadcast %103 : f32 to vector<8x128xf32>
    %564 = arith.mulf %346, %563 : vector<8x128xf32>
    %565 = arith.addf %562, %564 : vector<8x128xf32>
    %566 = vector.broadcast %111 : f32 to vector<8x128xf32>
    %567 = arith.addf %565, %566 : vector<8x128xf32>
    %cst_26 = arith.constant 0.00999999977 : f32
    %568 = vector.broadcast %cst_26 : f32 to vector<8x128xf32>
    %569 = arith.mulf %568, %567 : vector<8x128xf32>
    %570 = arith.maximumf %567, %569 : vector<8x128xf32>
    %571 = vector.broadcast %112 : f32 to vector<8x128xf32>
    %572 = arith.mulf %374, %571 : vector<8x128xf32>
    %573 = vector.broadcast %113 : f32 to vector<8x128xf32>
    %574 = arith.mulf %402, %573 : vector<8x128xf32>
    %575 = arith.addf %572, %574 : vector<8x128xf32>
    %576 = vector.broadcast %114 : f32 to vector<8x128xf32>
    %577 = arith.mulf %430, %576 : vector<8x128xf32>
    %578 = arith.addf %575, %577 : vector<8x128xf32>
    %579 = vector.broadcast %115 : f32 to vector<8x128xf32>
    %580 = arith.mulf %458, %579 : vector<8x128xf32>
    %581 = arith.addf %578, %580 : vector<8x128xf32>
    %582 = vector.broadcast %116 : f32 to vector<8x128xf32>
    %583 = arith.mulf %486, %582 : vector<8x128xf32>
    %584 = arith.addf %581, %583 : vector<8x128xf32>
    %585 = vector.broadcast %117 : f32 to vector<8x128xf32>
    %586 = arith.mulf %514, %585 : vector<8x128xf32>
    %587 = arith.addf %584, %586 : vector<8x128xf32>
    %588 = vector.broadcast %118 : f32 to vector<8x128xf32>
    %589 = arith.mulf %542, %588 : vector<8x128xf32>
    %590 = arith.addf %587, %589 : vector<8x128xf32>
    %591 = vector.broadcast %119 : f32 to vector<8x128xf32>
    %592 = arith.mulf %570, %591 : vector<8x128xf32>
    %593 = arith.addf %590, %592 : vector<8x128xf32>
    %594 = vector.broadcast %176 : f32 to vector<8x128xf32>
    %595 = arith.addf %593, %594 : vector<8x128xf32>
    %cst_27 = arith.constant 0.00999999977 : f32
    %596 = vector.broadcast %cst_27 : f32 to vector<8x128xf32>
    %597 = arith.mulf %596, %595 : vector<8x128xf32>
    %598 = arith.maximumf %595, %597 : vector<8x128xf32>
    %599 = vector.broadcast %120 : f32 to vector<8x128xf32>
    %600 = arith.mulf %374, %599 : vector<8x128xf32>
    %601 = vector.broadcast %121 : f32 to vector<8x128xf32>
    %602 = arith.mulf %402, %601 : vector<8x128xf32>
    %603 = arith.addf %600, %602 : vector<8x128xf32>
    %604 = vector.broadcast %122 : f32 to vector<8x128xf32>
    %605 = arith.mulf %430, %604 : vector<8x128xf32>
    %606 = arith.addf %603, %605 : vector<8x128xf32>
    %607 = vector.broadcast %123 : f32 to vector<8x128xf32>
    %608 = arith.mulf %458, %607 : vector<8x128xf32>
    %609 = arith.addf %606, %608 : vector<8x128xf32>
    %610 = vector.broadcast %124 : f32 to vector<8x128xf32>
    %611 = arith.mulf %486, %610 : vector<8x128xf32>
    %612 = arith.addf %609, %611 : vector<8x128xf32>
    %613 = vector.broadcast %125 : f32 to vector<8x128xf32>
    %614 = arith.mulf %514, %613 : vector<8x128xf32>
    %615 = arith.addf %612, %614 : vector<8x128xf32>
    %616 = vector.broadcast %126 : f32 to vector<8x128xf32>
    %617 = arith.mulf %542, %616 : vector<8x128xf32>
    %618 = arith.addf %615, %617 : vector<8x128xf32>
    %619 = vector.broadcast %127 : f32 to vector<8x128xf32>
    %620 = arith.mulf %570, %619 : vector<8x128xf32>
    %621 = arith.addf %618, %620 : vector<8x128xf32>
    %622 = vector.broadcast %177 : f32 to vector<8x128xf32>
    %623 = arith.addf %621, %622 : vector<8x128xf32>
    %cst_28 = arith.constant 0.00999999977 : f32
    %624 = vector.broadcast %cst_28 : f32 to vector<8x128xf32>
    %625 = arith.mulf %624, %623 : vector<8x128xf32>
    %626 = arith.maximumf %623, %625 : vector<8x128xf32>
    %627 = vector.broadcast %128 : f32 to vector<8x128xf32>
    %628 = arith.mulf %374, %627 : vector<8x128xf32>
    %629 = vector.broadcast %129 : f32 to vector<8x128xf32>
    %630 = arith.mulf %402, %629 : vector<8x128xf32>
    %631 = arith.addf %628, %630 : vector<8x128xf32>
    %632 = vector.broadcast %130 : f32 to vector<8x128xf32>
    %633 = arith.mulf %430, %632 : vector<8x128xf32>
    %634 = arith.addf %631, %633 : vector<8x128xf32>
    %635 = vector.broadcast %131 : f32 to vector<8x128xf32>
    %636 = arith.mulf %458, %635 : vector<8x128xf32>
    %637 = arith.addf %634, %636 : vector<8x128xf32>
    %638 = vector.broadcast %132 : f32 to vector<8x128xf32>
    %639 = arith.mulf %486, %638 : vector<8x128xf32>
    %640 = arith.addf %637, %639 : vector<8x128xf32>
    %641 = vector.broadcast %133 : f32 to vector<8x128xf32>
    %642 = arith.mulf %514, %641 : vector<8x128xf32>
    %643 = arith.addf %640, %642 : vector<8x128xf32>
    %644 = vector.broadcast %134 : f32 to vector<8x128xf32>
    %645 = arith.mulf %542, %644 : vector<8x128xf32>
    %646 = arith.addf %643, %645 : vector<8x128xf32>
    %647 = vector.broadcast %135 : f32 to vector<8x128xf32>
    %648 = arith.mulf %570, %647 : vector<8x128xf32>
    %649 = arith.addf %646, %648 : vector<8x128xf32>
    %650 = vector.broadcast %178 : f32 to vector<8x128xf32>
    %651 = arith.addf %649, %650 : vector<8x128xf32>
    %cst_29 = arith.constant 0.00999999977 : f32
    %652 = vector.broadcast %cst_29 : f32 to vector<8x128xf32>
    %653 = arith.mulf %652, %651 : vector<8x128xf32>
    %654 = arith.maximumf %651, %653 : vector<8x128xf32>
    %655 = vector.broadcast %136 : f32 to vector<8x128xf32>
    %656 = arith.mulf %374, %655 : vector<8x128xf32>
    %657 = vector.broadcast %137 : f32 to vector<8x128xf32>
    %658 = arith.mulf %402, %657 : vector<8x128xf32>
    %659 = arith.addf %656, %658 : vector<8x128xf32>
    %660 = vector.broadcast %138 : f32 to vector<8x128xf32>
    %661 = arith.mulf %430, %660 : vector<8x128xf32>
    %662 = arith.addf %659, %661 : vector<8x128xf32>
    %663 = vector.broadcast %139 : f32 to vector<8x128xf32>
    %664 = arith.mulf %458, %663 : vector<8x128xf32>
    %665 = arith.addf %662, %664 : vector<8x128xf32>
    %666 = vector.broadcast %140 : f32 to vector<8x128xf32>
    %667 = arith.mulf %486, %666 : vector<8x128xf32>
    %668 = arith.addf %665, %667 : vector<8x128xf32>
    %669 = vector.broadcast %141 : f32 to vector<8x128xf32>
    %670 = arith.mulf %514, %669 : vector<8x128xf32>
    %671 = arith.addf %668, %670 : vector<8x128xf32>
    %672 = vector.broadcast %142 : f32 to vector<8x128xf32>
    %673 = arith.mulf %542, %672 : vector<8x128xf32>
    %674 = arith.addf %671, %673 : vector<8x128xf32>
    %675 = vector.broadcast %143 : f32 to vector<8x128xf32>
    %676 = arith.mulf %570, %675 : vector<8x128xf32>
    %677 = arith.addf %674, %676 : vector<8x128xf32>
    %678 = vector.broadcast %179 : f32 to vector<8x128xf32>
    %679 = arith.addf %677, %678 : vector<8x128xf32>
    %cst_30 = arith.constant 0.00999999977 : f32
    %680 = vector.broadcast %cst_30 : f32 to vector<8x128xf32>
    %681 = arith.mulf %680, %679 : vector<8x128xf32>
    %682 = arith.maximumf %679, %681 : vector<8x128xf32>
    %683 = vector.broadcast %144 : f32 to vector<8x128xf32>
    %684 = arith.mulf %374, %683 : vector<8x128xf32>
    %685 = vector.broadcast %145 : f32 to vector<8x128xf32>
    %686 = arith.mulf %402, %685 : vector<8x128xf32>
    %687 = arith.addf %684, %686 : vector<8x128xf32>
    %688 = vector.broadcast %146 : f32 to vector<8x128xf32>
    %689 = arith.mulf %430, %688 : vector<8x128xf32>
    %690 = arith.addf %687, %689 : vector<8x128xf32>
    %691 = vector.broadcast %147 : f32 to vector<8x128xf32>
    %692 = arith.mulf %458, %691 : vector<8x128xf32>
    %693 = arith.addf %690, %692 : vector<8x128xf32>
    %694 = vector.broadcast %148 : f32 to vector<8x128xf32>
    %695 = arith.mulf %486, %694 : vector<8x128xf32>
    %696 = arith.addf %693, %695 : vector<8x128xf32>
    %697 = vector.broadcast %149 : f32 to vector<8x128xf32>
    %698 = arith.mulf %514, %697 : vector<8x128xf32>
    %699 = arith.addf %696, %698 : vector<8x128xf32>
    %700 = vector.broadcast %150 : f32 to vector<8x128xf32>
    %701 = arith.mulf %542, %700 : vector<8x128xf32>
    %702 = arith.addf %699, %701 : vector<8x128xf32>
    %703 = vector.broadcast %151 : f32 to vector<8x128xf32>
    %704 = arith.mulf %570, %703 : vector<8x128xf32>
    %705 = arith.addf %702, %704 : vector<8x128xf32>
    %706 = vector.broadcast %180 : f32 to vector<8x128xf32>
    %707 = arith.addf %705, %706 : vector<8x128xf32>
    %cst_31 = arith.constant 0.00999999977 : f32
    %708 = vector.broadcast %cst_31 : f32 to vector<8x128xf32>
    %709 = arith.mulf %708, %707 : vector<8x128xf32>
    %710 = arith.maximumf %707, %709 : vector<8x128xf32>
    %711 = vector.broadcast %152 : f32 to vector<8x128xf32>
    %712 = arith.mulf %374, %711 : vector<8x128xf32>
    %713 = vector.broadcast %153 : f32 to vector<8x128xf32>
    %714 = arith.mulf %402, %713 : vector<8x128xf32>
    %715 = arith.addf %712, %714 : vector<8x128xf32>
    %716 = vector.broadcast %154 : f32 to vector<8x128xf32>
    %717 = arith.mulf %430, %716 : vector<8x128xf32>
    %718 = arith.addf %715, %717 : vector<8x128xf32>
    %719 = vector.broadcast %155 : f32 to vector<8x128xf32>
    %720 = arith.mulf %458, %719 : vector<8x128xf32>
    %721 = arith.addf %718, %720 : vector<8x128xf32>
    %722 = vector.broadcast %156 : f32 to vector<8x128xf32>
    %723 = arith.mulf %486, %722 : vector<8x128xf32>
    %724 = arith.addf %721, %723 : vector<8x128xf32>
    %725 = vector.broadcast %157 : f32 to vector<8x128xf32>
    %726 = arith.mulf %514, %725 : vector<8x128xf32>
    %727 = arith.addf %724, %726 : vector<8x128xf32>
    %728 = vector.broadcast %158 : f32 to vector<8x128xf32>
    %729 = arith.mulf %542, %728 : vector<8x128xf32>
    %730 = arith.addf %727, %729 : vector<8x128xf32>
    %731 = vector.broadcast %159 : f32 to vector<8x128xf32>
    %732 = arith.mulf %570, %731 : vector<8x128xf32>
    %733 = arith.addf %730, %732 : vector<8x128xf32>
    %734 = vector.broadcast %181 : f32 to vector<8x128xf32>
    %735 = arith.addf %733, %734 : vector<8x128xf32>
    %cst_32 = arith.constant 0.00999999977 : f32
    %736 = vector.broadcast %cst_32 : f32 to vector<8x128xf32>
    %737 = arith.mulf %736, %735 : vector<8x128xf32>
    %738 = arith.maximumf %735, %737 : vector<8x128xf32>
    %739 = vector.broadcast %160 : f32 to vector<8x128xf32>
    %740 = arith.mulf %374, %739 : vector<8x128xf32>
    %741 = vector.broadcast %161 : f32 to vector<8x128xf32>
    %742 = arith.mulf %402, %741 : vector<8x128xf32>
    %743 = arith.addf %740, %742 : vector<8x128xf32>
    %744 = vector.broadcast %162 : f32 to vector<8x128xf32>
    %745 = arith.mulf %430, %744 : vector<8x128xf32>
    %746 = arith.addf %743, %745 : vector<8x128xf32>
    %747 = vector.broadcast %163 : f32 to vector<8x128xf32>
    %748 = arith.mulf %458, %747 : vector<8x128xf32>
    %749 = arith.addf %746, %748 : vector<8x128xf32>
    %750 = vector.broadcast %164 : f32 to vector<8x128xf32>
    %751 = arith.mulf %486, %750 : vector<8x128xf32>
    %752 = arith.addf %749, %751 : vector<8x128xf32>
    %753 = vector.broadcast %165 : f32 to vector<8x128xf32>
    %754 = arith.mulf %514, %753 : vector<8x128xf32>
    %755 = arith.addf %752, %754 : vector<8x128xf32>
    %756 = vector.broadcast %166 : f32 to vector<8x128xf32>
    %757 = arith.mulf %542, %756 : vector<8x128xf32>
    %758 = arith.addf %755, %757 : vector<8x128xf32>
    %759 = vector.broadcast %167 : f32 to vector<8x128xf32>
    %760 = arith.mulf %570, %759 : vector<8x128xf32>
    %761 = arith.addf %758, %760 : vector<8x128xf32>
    %762 = vector.broadcast %182 : f32 to vector<8x128xf32>
    %763 = arith.addf %761, %762 : vector<8x128xf32>
    %cst_33 = arith.constant 0.00999999977 : f32
    %764 = vector.broadcast %cst_33 : f32 to vector<8x128xf32>
    %765 = arith.mulf %764, %763 : vector<8x128xf32>
    %766 = arith.maximumf %763, %765 : vector<8x128xf32>
    %767 = vector.broadcast %168 : f32 to vector<8x128xf32>
    %768 = arith.mulf %374, %767 : vector<8x128xf32>
    %769 = vector.broadcast %169 : f32 to vector<8x128xf32>
    %770 = arith.mulf %402, %769 : vector<8x128xf32>
    %771 = arith.addf %768, %770 : vector<8x128xf32>
    %772 = vector.broadcast %170 : f32 to vector<8x128xf32>
    %773 = arith.mulf %430, %772 : vector<8x128xf32>
    %774 = arith.addf %771, %773 : vector<8x128xf32>
    %775 = vector.broadcast %171 : f32 to vector<8x128xf32>
    %776 = arith.mulf %458, %775 : vector<8x128xf32>
    %777 = arith.addf %774, %776 : vector<8x128xf32>
    %778 = vector.broadcast %172 : f32 to vector<8x128xf32>
    %779 = arith.mulf %486, %778 : vector<8x128xf32>
    %780 = arith.addf %777, %779 : vector<8x128xf32>
    %781 = vector.broadcast %173 : f32 to vector<8x128xf32>
    %782 = arith.mulf %514, %781 : vector<8x128xf32>
    %783 = arith.addf %780, %782 : vector<8x128xf32>
    %784 = vector.broadcast %174 : f32 to vector<8x128xf32>
    %785 = arith.mulf %542, %784 : vector<8x128xf32>
    %786 = arith.addf %783, %785 : vector<8x128xf32>
    %787 = vector.broadcast %175 : f32 to vector<8x128xf32>
    %788 = arith.mulf %570, %787 : vector<8x128xf32>
    %789 = arith.addf %786, %788 : vector<8x128xf32>
    %790 = vector.broadcast %183 : f32 to vector<8x128xf32>
    %791 = arith.addf %789, %790 : vector<8x128xf32>
    %cst_34 = arith.constant 0.00999999977 : f32
    %792 = vector.broadcast %cst_34 : f32 to vector<8x128xf32>
    %793 = arith.mulf %792, %791 : vector<8x128xf32>
    %794 = arith.maximumf %791, %793 : vector<8x128xf32>
    %795 = vector.broadcast %184 : f32 to vector<8x128xf32>
    %796 = arith.mulf %598, %795 : vector<8x128xf32>
    %797 = vector.broadcast %185 : f32 to vector<8x128xf32>
    %798 = arith.mulf %626, %797 : vector<8x128xf32>
    %799 = arith.addf %796, %798 : vector<8x128xf32>
    %800 = vector.broadcast %186 : f32 to vector<8x128xf32>
    %801 = arith.mulf %654, %800 : vector<8x128xf32>
    %802 = arith.addf %799, %801 : vector<8x128xf32>
    %803 = vector.broadcast %187 : f32 to vector<8x128xf32>
    %804 = arith.mulf %682, %803 : vector<8x128xf32>
    %805 = arith.addf %802, %804 : vector<8x128xf32>
    %806 = vector.broadcast %188 : f32 to vector<8x128xf32>
    %807 = arith.mulf %710, %806 : vector<8x128xf32>
    %808 = arith.addf %805, %807 : vector<8x128xf32>
    %809 = vector.broadcast %189 : f32 to vector<8x128xf32>
    %810 = arith.mulf %738, %809 : vector<8x128xf32>
    %811 = arith.addf %808, %810 : vector<8x128xf32>
    %812 = vector.broadcast %190 : f32 to vector<8x128xf32>
    %813 = arith.mulf %766, %812 : vector<8x128xf32>
    %814 = arith.addf %811, %813 : vector<8x128xf32>
    %815 = vector.broadcast %191 : f32 to vector<8x128xf32>
    %816 = arith.mulf %794, %815 : vector<8x128xf32>
    %817 = arith.addf %814, %816 : vector<8x128xf32>
    %818 = vector.broadcast %208 : f32 to vector<8x128xf32>
    %819 = arith.addf %817, %818 : vector<8x128xf32>
    %820 = vector.broadcast %192 : f32 to vector<8x128xf32>
    %821 = arith.mulf %598, %820 : vector<8x128xf32>
    %822 = vector.broadcast %193 : f32 to vector<8x128xf32>
    %823 = arith.mulf %626, %822 : vector<8x128xf32>
    %824 = arith.addf %821, %823 : vector<8x128xf32>
    %825 = vector.broadcast %194 : f32 to vector<8x128xf32>
    %826 = arith.mulf %654, %825 : vector<8x128xf32>
    %827 = arith.addf %824, %826 : vector<8x128xf32>
    %828 = vector.broadcast %195 : f32 to vector<8x128xf32>
    %829 = arith.mulf %682, %828 : vector<8x128xf32>
    %830 = arith.addf %827, %829 : vector<8x128xf32>
    %831 = vector.broadcast %196 : f32 to vector<8x128xf32>
    %832 = arith.mulf %710, %831 : vector<8x128xf32>
    %833 = arith.addf %830, %832 : vector<8x128xf32>
    %834 = vector.broadcast %197 : f32 to vector<8x128xf32>
    %835 = arith.mulf %738, %834 : vector<8x128xf32>
    %836 = arith.addf %833, %835 : vector<8x128xf32>
    %837 = vector.broadcast %198 : f32 to vector<8x128xf32>
    %838 = arith.mulf %766, %837 : vector<8x128xf32>
    %839 = arith.addf %836, %838 : vector<8x128xf32>
    %840 = vector.broadcast %199 : f32 to vector<8x128xf32>
    %841 = arith.mulf %794, %840 : vector<8x128xf32>
    %842 = arith.addf %839, %841 : vector<8x128xf32>
    %843 = vector.broadcast %209 : f32 to vector<8x128xf32>
    %844 = arith.addf %842, %843 : vector<8x128xf32>
    %845 = vector.broadcast %200 : f32 to vector<8x128xf32>
    %846 = arith.mulf %598, %845 : vector<8x128xf32>
    %847 = vector.broadcast %201 : f32 to vector<8x128xf32>
    %848 = arith.mulf %626, %847 : vector<8x128xf32>
    %849 = arith.addf %846, %848 : vector<8x128xf32>
    %850 = vector.broadcast %202 : f32 to vector<8x128xf32>
    %851 = arith.mulf %654, %850 : vector<8x128xf32>
    %852 = arith.addf %849, %851 : vector<8x128xf32>
    %853 = vector.broadcast %203 : f32 to vector<8x128xf32>
    %854 = arith.mulf %682, %853 : vector<8x128xf32>
    %855 = arith.addf %852, %854 : vector<8x128xf32>
    %856 = vector.broadcast %204 : f32 to vector<8x128xf32>
    %857 = arith.mulf %710, %856 : vector<8x128xf32>
    %858 = arith.addf %855, %857 : vector<8x128xf32>
    %859 = vector.broadcast %205 : f32 to vector<8x128xf32>
    %860 = arith.mulf %738, %859 : vector<8x128xf32>
    %861 = arith.addf %858, %860 : vector<8x128xf32>
    %862 = vector.broadcast %206 : f32 to vector<8x128xf32>
    %863 = arith.mulf %766, %862 : vector<8x128xf32>
    %864 = arith.addf %861, %863 : vector<8x128xf32>
    %865 = vector.broadcast %207 : f32 to vector<8x128xf32>
    %866 = arith.mulf %794, %865 : vector<8x128xf32>
    %867 = arith.addf %864, %866 : vector<8x128xf32>
    %868 = vector.broadcast %210 : f32 to vector<8x128xf32>
    %869 = arith.addf %867, %868 : vector<8x128xf32>
    %c0_35 = arith.constant 0 : index
    %c0_36 = arith.constant 0 : index
    %c0_37 = arith.constant 0 : index
    %870 = vector.load %arg3[%c0_35, %c0_36, %c0_37] : memref<3x8x128xf32, #tpu.memory_space<vmem>>, vector<1x8x128xf32>
    %871 = vector.shape_cast %870 : vector<1x8x128xf32> to vector<8x128xf32>
    %872 = vector.shape_cast %819 : vector<8x128xf32> to vector<1x8x128xf32>
    tpu.vector_store %arg3[%c0_35, %c0_36, %c0_37], %872 {strides = array<i32>} : memref<3x8x128xf32, #tpu.memory_space<vmem>>, vector<1x8x128xf32>,
    %c1_38 = arith.constant 1 : index
    %c0_39 = arith.constant 0 : index
    %c0_40 = arith.constant 0 : index
    %873 = vector.load %arg3[%c1_38, %c0_39, %c0_40] : memref<3x8x128xf32, #tpu.memory_space<vmem>>, vector<1x8x128xf32>
    %874 = vector.shape_cast %873 : vector<1x8x128xf32> to vector<8x128xf32>
    %875 = vector.shape_cast %844 : vector<8x128xf32> to vector<1x8x128xf32>
    tpu.vector_store %arg3[%c1_38, %c0_39, %c0_40], %875 {strides = array<i32>} : memref<3x8x128xf32, #tpu.memory_space<vmem>>, vector<1x8x128xf32>,
    %c2_41 = arith.constant 2 : index
    %c0_42 = arith.constant 0 : index
    %c0_43 = arith.constant 0 : index
    %876 = vector.load %arg3[%c2_41, %c0_42, %c0_43] : memref<3x8x128xf32, #tpu.memory_space<vmem>>, vector<1x8x128xf32>
    %877 = vector.shape_cast %876 : vector<1x8x128xf32> to vector<8x128xf32>
    %878 = vector.shape_cast %869 : vector<8x128xf32> to vector<1x8x128xf32>
    tpu.vector_store %arg3[%c2_41, %c0_42, %c0_43], %878 {strides = array<i32>} : memref<3x8x128xf32, #tpu.memory_space<vmem>>, vector<1x8x128xf32>,
    return
  }
  func.func @transform_0(%arg0: i32) -> i32 {
    %c0_i32 = arith.constant 0 : i32
    %c0_i32_0 = arith.constant 0 : i32
    return %c0_i32 : i32
  }
  func.func @transform_1(%arg0: i32) -> (i32, i32, i32) {
    %c0_i32 = arith.constant 0 : i32
    %c0_i32_0 = arith.constant 0 : i32
    %c0_i32_1 = arith.constant 0 : i32
    return %c0_i32, %arg0, %c0_i32_0 : i32, i32, i32
  }
  func.func @transform_2(%arg0: i32) -> (i32, i32, i32) {
    %c0_i32 = arith.constant 0 : i32
    %c0_i32_0 = arith.constant 0 : i32
    %c0_i32_1 = arith.constant 0 : i32
    return %c0_i32, %arg0, %c0_i32_0 : i32, i32, i32
  }
}

</mosaic_0001>

<llo_original>
// kernel: irisnet_forward.1
$region0: #{irisnet_forward.1}
  #allocation0 [shape = 'u32[]', space=smem, size = 0x4, offset = 0x4, fixed_abs, tag = 'smem constant byte address 0x4 - core index']
  #allocation1 [shape = 'u32[144,128]{1,0:T(1,128)}', space=vmem, size = 0x12000, scoped, tag = 'internal scratch']
  %s0 = inlined_call_operand.vmem [shape: f32[211], index: 0, kind: input, shape index: {}]
  %s1 = inlined_call_operand.vmem [shape: f32[4,8,128], index: 1, kind: input, shape index: {}]
  %s2 = inlined_call_operand.vmem [shape: f32[3,8,128], index: 2, kind: output, shape index: {}]
  %s3 = sld [smem:[#allocation0]]
  $region22: #{irisnet_forward.1} parent=0
    _
  %s5 = ssub.s32 1, %s3
  %s6 = scalar_select 0, %s5, %s3
  $region1: #{irisnet_forward.1} parent=0
    #allocation2 [shape = 'u8[1024]{0}', space=smem, size = 0x400, scoped, tag = 'input window, operand 0, single buffered']
    #allocation3 [shape = 's32[1]{0}', space=sflag, size = 0x4, scoped, tag = 'scoped memory for irisnet_forward.1']
    %7 = vsyncpa [#allocation3], 0
    // Predicated region
    $region2: #{irisnet_forward.1} parent=1 // pred_check
      _
    $region3: #{irisnet_forward.1} parent=1 // pred_check_branch
      %9 = sbr.rel (0) target = $region5
    $region4: #{irisnet_forward.1} parent=1 // pred_region
      %s11 = ssub.s32 32, 32
      %12 = vsyncadd [#allocation3], %s11
      %s14 = sshll.u32 %s0, 4
      %s15 = int_to_ptr.vmem [resolvable:$true] %s14
      %17 = dma.vmem_to_smem %s15, 32, [#allocation2], [#allocation3]
    $region5: #{irisnet_forward.1} parent=1 // pred_fallthru
      _
    // Predicated region
    $region6: #{irisnet_forward.1} parent=1 // pred_check
      _
    $region7: #{irisnet_forward.1} parent=1 // pred_check_branch
      %19 = sbr.rel (0) target = $region9
    $region8: #{irisnet_forward.1} parent=1 // pred_region
      _
    $region9: #{irisnet_forward.1} parent=1 // pred_fallthru
      _
    // Predicated region
    $region10: #{irisnet_forward.1} parent=1 // pred_check
      _
    $region11: #{irisnet_forward.1} parent=1 // pred_check_branch
      %21 = sbr.rel (0) target = $region13
    $region12: #{irisnet_forward.1} parent=1 // pred_region
      %22 = dma.done [#allocation3], 32
    $region13: #{irisnet_forward.1} parent=1 // pred_fallthru
      _
    %23 = sfence
    %s24 = sld [smem:[#allocation2]]
    %s25 = sld [smem:[#allocation2 + $0x1]]
    %s26 = sld [smem:[#allocation2 + $0x2]]
    %s27 = sld [smem:[#allocation2 + $0x3]]
    %s28 = sld [smem:[#allocation2 + $0x4]]
    %s29 = sld [smem:[#allocation2 + $0x5]]
    %s30 = sld [smem:[#allocation2 + $0x6]]
    %s31 = sld [smem:[#allocation2 + $0x7]]
    %s32 = sld [smem:[#allocation2 + $0x8]]
    %s33 = sld [smem:[#allocation2 + $0x9]]
    %s34 = sld [smem:[#allocation2 + $0xa]]
    %s35 = sld [smem:[#allocation2 + $0xb]]
    %s36 = sld [smem:[#allocation2 + $0xc]]
    %s37 = sld [smem:[#allocation2 + $0xd]]
    %s38 = sld [smem:[#allocation2 + $0xe]]
    %s39 = sld [smem:[#allocation2 + $0xf]]
    %s40 = sld [smem:[#allocation2 + $0x10]]
    %s41 = sld [smem:[#allocation2 + $0x11]]
    %s42 = sld [smem:[#allocation2 + $0x12]]
    %s43 = sld [smem:[#allocation2 + $0x13]]
    %s44 = sld [smem:[#allocation2 + $0x14]]
    %s45 = sld [smem:[#allocation2 + $0x15]]
    %s46 = sld [smem:[#allocation2 + $0x16]]
    %s47 = sld [smem:[#allocation2 + $0x17]]
    %s48 = sld [smem:[#allocation2 + $0x18]]
    %s49 = sld [smem:[#allocation2 + $0x19]]
    %s50 = sld [smem:[#allocation2 + $0x1a]]
    %s51 = sld [smem:[#allocation2 + $0x1b]]
    %s52 = sld [smem:[#allocation2 + $0x1c]]
    %s53 = sld [smem:[#allocation2 + $0x1d]]
    %s54 = sld [smem:[#allocation2 + $0x1e]]
    %s55 = sld [smem:[#allocation2 + $0x1f]]
    %s56 = sld [smem:[#allocation2 + $0x20]]
    %s57 = sld [smem:[#allocation2 + $0x21]]
    %s58 = sld [smem:[#allocation2 + $0x22]]
    %s59 = sld [smem:[#allocation2 + $0x23]]
    %s60 = sld [smem:[#allocation2 + $0x24]]
    %s61 = sld [smem:[#allocation2 + $0x25]]
    %s62 = sld [smem:[#allocation2 + $0x26]]
    %s63 = sld [smem:[#allocation2 + $0x27]]
    %s64 = sld [smem:[#allocation2 + $0x28]]
    %s65 = sld [smem:[#allocation2 + $0x29]]
    %s66 = sld [smem:[#allocation2 + $0x2a]]
    %s67 = sld [smem:[#allocation2 + $0x2b]]
    %s68 = sld [smem:[#allocation2 + $0x2c]]
    %s69 = sld [smem:[#allocation2 + $0x2d]]
    %s70 = sld [smem:[#allocation2 + $0x2e]]
    %s71 = sld [smem:[#allocation2 + $0x2f]]
    %s72 = sld [smem:[#allocation2 + $0x30]]
    %s73 = sld [smem:[#allocation2 + $0x31]]
    %s74 = sld [smem:[#allocation2 + $0x32]]
    %s75 = sld [smem:[#allocation2 + $0x33]]
    %s76 = sld [smem:[#allocation2 + $0x34]]
    %s77 = sld [smem:[#allocation2 + $0x35]]
    %s78 = sld [smem:[#allocation2 + $0x36]]
    %s79 = sld [smem:[#allocation2 + $0x37]]
    %s80 = sld [smem:[#allocation2 + $0x38]]
    %s81 = sld [smem:[#allocation2 + $0x39]]
    %s82 = sld [smem:[#allocation2 + $0x3a]]
    %s83 = sld [smem:[#allocation2 + $0x3b]]
    %s84 = sld [smem:[#allocation2 + $0x3c]]
    %s85 = sld [smem:[#allocation2 + $0x3d]]
    %s86 = sld [smem:[#allocation2 + $0x3e]]
    %s87 = sld [smem:[#allocation2 + $0x3f]]
    %s88 = sld [smem:[#allocation2 + $0x40]]
    %s89 = sld [smem:[#allocation2 + $0x41]]
    %s90 = sld [smem:[#allocation2 + $0x42]]
    %s91 = sld [smem:[#allocation2 + $0x43]]
    %s92 = sld [smem:[#allocation2 + $0x44]]
    %s93 = sld [smem:[#allocation2 + $0x45]]
    %s94 = sld [smem:[#allocation2 + $0x46]]
    %s95 = sld [smem:[#allocation2 + $0x47]]
    %s96 = sld [smem:[#allocation2 + $0x48]]
    %s97 = sld [smem:[#allocation2 + $0x49]]
    %s98 = sld [smem:[#allocation2 + $0x4a]]
    %s99 = sld [smem:[#allocation2 + $0x4b]]
    %s100 = sld [smem:[#allocation2 + $0x4c]]
    %s101 = sld [smem:[#allocation2 + $0x4d]]
    %s102 = sld [smem:[#allocation2 + $0x4e]]
    %s103 = sld [smem:[#allocation2 + $0x4f]]
    %s104 = sld [smem:[#allocation2 + $0x50]]
    %s105 = sld [smem:[#allocation2 + $0x51]]
    %s106 = sld [smem:[#allocation2 + $0x52]]
    %s107 = sld [smem:[#allocation2 + $0x53]]
    %s108 = sld [smem:[#allocation2 + $0x54]]
    %s109 = sld [smem:[#allocation2 + $0x55]]
    %s110 = sld [smem:[#allocation2 + $0x56]]
    %s111 = sld [smem:[#allocation2 + $0x57]]
    %s112 = sld [smem:[#allocation2 + $0x58]]
    %s113 = sld [smem:[#allocation2 + $0x59]]
    %s114 = sld [smem:[#allocation2 + $0x5a]]
    %s115 = sld [smem:[#allocation2 + $0x5b]]
    %s116 = sld [smem:[#allocation2 + $0x5c]]
    %s117 = sld [smem:[#allocation2 + $0x5d]]
    %s118 = sld [smem:[#allocation2 + $0x5e]]
    %s119 = sld [smem:[#allocation2 + $0x5f]]
    %s120 = sld [smem:[#allocation2 + $0x60]]
    %s121 = sld [smem:[#allocation2 + $0x61]]
    %s122 = sld [smem:[#allocation2 + $0x62]]
    %s123 = sld [smem:[#allocation2 + $0x63]]
    %s124 = sld [smem:[#allocation2 + $0x64]]
    %s125 = sld [smem:[#allocation2 + $0x65]]
    %s126 = sld [smem:[#allocation2 + $0x66]]
    %s127 = sld [smem:[#allocation2 + $0x67]]
    %s128 = sld [smem:[#allocation2 + $0x68]]
    %s129 = sld [smem:[#allocation2 + $0x69]]
    %s130 = sld [smem:[#allocation2 + $0x6a]]
    %s131 = sld [smem:[#allocation2 + $0x6b]]
    %s132 = sld [smem:[#allocation2 + $0x6c]]
    %s133 = sld [smem:[#allocation2 + $0x6d]]
    %s134 = sld [smem:[#allocation2 + $0x6e]]
    %s135 = sld [smem:[#allocation2 + $0x6f]]
    %s136 = sld [smem:[#allocation2 + $0x70]]
    %s137 = sld [smem:[#allocation2 + $0x71]]
    %s138 = sld [smem:[#allocation2 + $0x72]]
    %s139 = sld [smem:[#allocation2 + $0x73]]
    %s140 = sld [smem:[#allocation2 + $0x74]]
    %s141 = sld [smem:[#allocation2 + $0x75]]
    %s142 = sld [smem:[#allocation2 + $0x76]]
    %s143 = sld [smem:[#allocation2 + $0x77]]
    %s144 = sld [smem:[#allocation2 + $0x78]]
    %s145 = sld [smem:[#allocation2 + $0x79]]
    %s146 = sld [smem:[#allocation2 + $0x7a]]
    %s147 = sld [smem:[#allocation2 + $0x7b]]
    %s148 = sld [smem:[#allocation2 + $0x7c]]
    %s149 = sld [smem:[#allocation2 + $0x7d]]
    %s150 = sld [smem:[#allocation2 + $0x7e]]
    %s151 = sld [smem:[#allocation2 + $0x7f]]
    %s152 = sld [smem:[#allocation2 + $0x80]]
    %s153 = sld [smem:[#allocation2 + $0x81]]
    %s154 = sld [smem:[#allocation2 + $0x82]]
    %s155 = sld [smem:[#allocation2 + $0x83]]
    %s156 = sld [smem:[#allocation2 + $0x84]]
    %s157 = sld [smem:[#allocation2 + $0x85]]
    %s158 = sld [smem:[#allocation2 + $0x86]]
    %s159 = sld [smem:[#allocation2 + $0x87]]
    %s160 = sld [smem:[#allocation2 + $0x88]]
    %s161 = sld [smem:[#allocation2 + $0x89]]
    %s162 = sld [smem:[#allocation2 + $0x8a]]
    %s163 = sld [smem:[#allocation2 + $0x8b]]
    %s164 = sld [smem:[#allocation2 + $0x8c]]
    %s165 = sld [smem:[#allocation2 + $0x8d]]
    %s166 = sld [smem:[#allocation2 + $0x8e]]
    %s167 = sld [smem:[#allocation2 + $0x8f]]
    %s168 = sld [smem:[#allocation2 + $0x90]]
    %s169 = sld [smem:[#allocation2 + $0x91]]
    %s170 = sld [smem:[#allocation2 + $0x92]]
    %s171 = sld [smem:[#allocation2 + $0x93]]
    %s172 = sld [smem:[#allocation2 + $0x94]]
    %s173 = sld [smem:[#allocation2 + $0x95]]
    %s174 = sld [smem:[#allocation2 + $0x96]]
    %s175 = sld [smem:[#allocation2 + $0x97]]
    %s176 = sld [smem:[#allocation2 + $0x98]]
    %s177 = sld [smem:[#allocation2 + $0x99]]
    %s178 = sld [smem:[#allocation2 + $0x9a]]
    %s179 = sld [smem:[#allocation2 + $0x9b]]
    %s180 = sld [smem:[#allocation2 + $0x9c]]
    %s181 = sld [smem:[#allocation2 + $0x9d]]
    %s182 = sld [smem:[#allocation2 + $0x9e]]
    %s183 = sld [smem:[#allocation2 + $0x9f]]
    %s184 = sld [smem:[#allocation2 + $0xa0]]
    %s185 = sld [smem:[#allocation2 + $0xa1]]
    %s186 = sld [smem:[#allocation2 + $0xa2]]
    %s187 = sld [smem:[#allocation2 + $0xa3]]
    %s188 = sld [smem:[#allocation2 + $0xa4]]
    %s189 = sld [smem:[#allocation2 + $0xa5]]
    %s190 = sld [smem:[#allocation2 + $0xa6]]
    %s191 = sld [smem:[#allocation2 + $0xa7]]
    %s192 = sld [smem:[#allocation2 + $0xa8]]
    %s193 = sld [smem:[#allocation2 + $0xa9]]
    %s194 = sld [smem:[#allocation2 + $0xaa]]
    %s195 = sld [smem:[#allocation2 + $0xab]]
    %s196 = sld [smem:[#allocation2 + $0xac]]
    %s197 = sld [smem:[#allocation2 + $0xad]]
    %s198 = sld [smem:[#allocation2 + $0xae]]
    %s199 = sld [smem:[#allocation2 + $0xaf]]
    %s200 = sld [smem:[#allocation2 + $0xb0]]
    %s201 = sld [smem:[#allocation2 + $0xb1]]
    %s202 = sld [smem:[#allocation2 + $0xb2]]
    %s203 = sld [smem:[#allocation2 + $0xb3]]
    %s204 = sld [smem:[#allocation2 + $0xb4]]
    %s205 = sld [smem:[#allocation2 + $0xb5]]
    %s206 = sld [smem:[#allocation2 + $0xb6]]
    %s207 = sld [smem:[#allocation2 + $0xb7]]
    %s208 = sld [smem:[#allocation2 + $0xb8]]
    %s209 = sld [smem:[#allocation2 + $0xb9]]
    %s210 = sld [smem:[#allocation2 + $0xba]]
    %s211 = sld [smem:[#allocation2 + $0xbb]]
    %s212 = sld [smem:[#allocation2 + $0xbc]]
    %s213 = sld [smem:[#allocation2 + $0xbd]]
    %s214 = sld [smem:[#allocation2 + $0xbe]]
    %s215 = sld [smem:[#allocation2 + $0xbf]]
    %s216 = sld [smem:[#allocation2 + $0xc0]]
    %s217 = sld [smem:[#allocation2 + $0xc1]]
    %s218 = sld [smem:[#allocation2 + $0xc2]]
    %s219 = sld [smem:[#allocation2 + $0xc3]]
    %s220 = sld [smem:[#allocation2 + $0xc4]]
    %s221 = sld [smem:[#allocation2 + $0xc5]]
    %s222 = sld [smem:[#allocation2 + $0xc6]]
    %s223 = sld [smem:[#allocation2 + $0xc7]]
    %s224 = sld [smem:[#allocation2 + $0xc8]]
    %s225 = sld [smem:[#allocation2 + $0xc9]]
    %s226 = sld [smem:[#allocation2 + $0xca]]
    %s227 = sld [smem:[#allocation2 + $0xcb]]
    %s228 = sld [smem:[#allocation2 + $0xcc]]
    %s229 = sld [smem:[#allocation2 + $0xcd]]
    %s230 = sld [smem:[#allocation2 + $0xce]]
    %s231 = sld [smem:[#allocation2 + $0xcf]]
    %s232 = sld [smem:[#allocation2 + $0xd0]]
    %s233 = sld [smem:[#allocation2 + $0xd1]]
    %s234 = sld [smem:[#allocation2 + $0xd2]]
    %v235 = vld [vmem:[%s1] sm:$0xff]
    %s236 = scalar_lea.vmem %s1, 8
    %v237 = vld [vmem:[%s236] sm:$0xff]
    %s238 = scalar_lea.vmem %s1, 16
    %v239 = vld [vmem:[%s238] sm:$0xff]
    %s240 = scalar_lea.vmem %s1, 24
    %v241 = vld [vmem:[%s240] sm:$0xff]
    %v242 = vstv %s24
    %v243 = vmul.f32 %v235, %v242
    %v244 = vstv %s25
    %v245 = vmul.f32 %v237, %v244
    %v246 = vadd.f32 %v243, %v245
    %v247 = vstv %s26
    %v248 = vmul.f32 %v239, %v247
    %v249 = vadd.f32 %v246, %v248
    %v250 = vstv %s27
    %v251 = vmul.f32 %v241, %v250
    %v252 = vadd.f32 %v249, %v251
    %v253 = vstv %s56
    %v254 = vadd.f32 %v252, %v253
    %v255 = vmul.f32 %v254, 0.01
    %v256 = vmax.f32 %v254, %v255
    %v257 = vstv %s28
    %v258 = vmul.f32 %v235, %v257
    %v259 = vstv %s29
    %v260 = vmul.f32 %v237, %v259
    %v261 = vadd.f32 %v258, %v260
    %v262 = vstv %s30
    %v263 = vmul.f32 %v239, %v262
    %v264 = vadd.f32 %v261, %v263
    %v265 = vstv %s31
    %v266 = vmul.f32 %v241, %v265
    %v267 = vadd.f32 %v264, %v266
    %v268 = vstv %s57
    %v269 = vadd.f32 %v267, %v268
    %v270 = vmul.f32 %v269, 0.01
    %v271 = vmax.f32 %v269, %v270
    %v272 = vstv %s32
    %v273 = vmul.f32 %v235, %v272
    %v274 = vstv %s33
    %v275 = vmul.f32 %v237, %v274
    %v276 = vadd.f32 %v273, %v275
    %v277 = vstv %s34
    %v278 = vmul.f32 %v239, %v277
    %v279 = vadd.f32 %v276, %v278
    %v280 = vstv %s35
    %v281 = vmul.f32 %v241, %v280
    %v282 = vadd.f32 %v279, %v281
    %v283 = vstv %s58
    %v284 = vadd.f32 %v282, %v283
    %v285 = vmul.f32 %v284, 0.01
    %v286 = vmax.f32 %v284, %v285
    %v287 = vstv %s36
    %v288 = vmul.f32 %v235, %v287
    %v289 = vstv %s37
    %v290 = vmul.f32 %v237, %v289
    %v291 = vadd.f32 %v288, %v290
    %v292 = vstv %s38
    %v293 = vmul.f32 %v239, %v292
    %v294 = vadd.f32 %v291, %v293
    %v295 = vstv %s39
    %v296 = vmul.f32 %v241, %v295
    %v297 = vadd.f32 %v294, %v296
    %v298 = vstv %s59
    %v299 = vadd.f32 %v297, %v298
    %v300 = vmul.f32 %v299, 0.01
    %v301 = vmax.f32 %v299, %v300
    %v302 = vstv %s40
    %v303 = vmul.f32 %v235, %v302
    %v304 = vstv %s41
    %v305 = vmul.f32 %v237, %v304
    %v306 = vadd.f32 %v303, %v305
    %v307 = vstv %s42
    %v308 = vmul.f32 %v239, %v307
    %v309 = vadd.f32 %v306, %v308
    %v310 = vstv %s43
    %v311 = vmul.f32 %v241, %v310
    %v312 = vadd.f32 %v309, %v311
    %v313 = vstv %s60
    %v314 = vadd.f32 %v312, %v313
    %v315 = vmul.f32 %v314, 0.01
    %v316 = vmax.f32 %v314, %v315
    %v317 = vstv %s44
    %v318 = vmul.f32 %v235, %v317
    %v319 = vstv %s45
    %v320 = vmul.f32 %v237, %v319
    %v321 = vadd.f32 %v318, %v320
    %v322 = vstv %s46
    %v323 = vmul.f32 %v239, %v322
    %v324 = vadd.f32 %v321, %v323
    %v325 = vstv %s47
    %v326 = vmul.f32 %v241, %v325
    %v327 = vadd.f32 %v324, %v326
    %v328 = vstv %s61
    %v329 = vadd.f32 %v327, %v328
    %v330 = vmul.f32 %v329, 0.01
    %v331 = vmax.f32 %v329, %v330
    %v332 = vstv %s48
    %v333 = vmul.f32 %v235, %v332
    %v334 = vstv %s49
    %v335 = vmul.f32 %v237, %v334
    %v336 = vadd.f32 %v333, %v335
    %v337 = vstv %s50
    %v338 = vmul.f32 %v239, %v337
    %v339 = vadd.f32 %v336, %v338
    %v340 = vstv %s51
    %v341 = vmul.f32 %v241, %v340
    %v342 = vadd.f32 %v339, %v341
    %v343 = vstv %s62
    %v344 = vadd.f32 %v342, %v343
    %v345 = vmul.f32 %v344, 0.01
    %v346 = vmax.f32 %v344, %v345
    %v347 = vstv %s52
    %v348 = vmul.f32 %v235, %v347
    %v349 = vstv %s53
    %v350 = vmul.f32 %v237, %v349
    %v351 = vadd.f32 %v348, %v350
    %v352 = vstv %s54
    %v353 = vmul.f32 %v239, %v352
    %v354 = vadd.f32 %v351, %v353
    %v355 = vstv %s55
    %v356 = vmul.f32 %v241, %v355
    %v357 = vadd.f32 %v354, %v356
    %v358 = vstv %s63
    %v359 = vadd.f32 %v357, %v358
    %v360 = vmul.f32 %v359, 0.01
    %v361 = vmax.f32 %v359, %v360
    %v362 = vstv %s64
    %v363 = vmul.f32 %v256, %v362
    %v364 = vstv %s65
    %v365 = vmul.f32 %v271, %v364
    %v366 = vadd.f32 %v363, %v365
    %v367 = vstv %s66
    %v368 = vmul.f32 %v286, %v367
    %v369 = vadd.f32 %v366, %v368
    %v370 = vstv %s67
    %v371 = vmul.f32 %v301, %v370
    %v372 = vadd.f32 %v369, %v371
    %v373 = vstv %s68
    %v374 = vmul.f32 %v316, %v373
    %v375 = vadd.f32 %v372, %v374
    %v376 = vstv %s69
    %v377 = vmul.f32 %v331, %v376
    %v378 = vadd.f32 %v375, %v377
    %v379 = vstv %s70
    %v380 = vmul.f32 %v346, %v379
    %v381 = vadd.f32 %v378, %v380
    %v382 = vstv %s71
    %v383 = vmul.f32 %v361, %v382
    %v384 = vadd.f32 %v381, %v383
    %v385 = vstv %s128
    %v386 = vadd.f32 %v384, %v385
    %v387 = vmul.f32 %v386, 0.01
    %v388 = vmax.f32 %v386, %v387
    %v389 = vstv %s72
    %v390 = vmul.f32 %v256, %v389
    %v391 = vstv %s73
    %v392 = vmul.f32 %v271, %v391
    %v393 = vadd.f32 %v390, %v392
    %v394 = vstv %s74
    %v395 = vmul.f32 %v286, %v394
    %v396 = vadd.f32 %v393, %v395
    %v397 = vstv %s75
    %v398 = vmul.f32 %v301, %v397
    %v399 = vadd.f32 %v396, %v398
    %v400 = vstv %s76
    %v401 = vmul.f32 %v316, %v400
    %v402 = vadd.f32 %v399, %v401
    %v403 = vstv %s77
    %v404 = vmul.f32 %v331, %v403
    %v405 = vadd.f32 %v402, %v404
    %v406 = vstv %s78
    %v407 = vmul.f32 %v346, %v406
    %v408 = vadd.f32 %v405, %v407
    %v409 = vstv %s79
    %v410 = vmul.f32 %v361, %v409
    %v411 = vadd.f32 %v408, %v410
    %v412 = vstv %s129
    %v413 = vadd.f32 %v411, %v412
    %v414 = vmul.f32 %v413, 0.01
    %v415 = vmax.f32 %v413, %v414
    %v416 = vstv %s80
    %v417 = vmul.f32 %v256, %v416
    %v418 = vstv %s81
    %v419 = vmul.f32 %v271, %v418
    %v420 = vadd.f32 %v417, %v419
    %v421 = vstv %s82
    %v422 = vmul.f32 %v286, %v421
    %v423 = vadd.f32 %v420, %v422
    %v424 = vstv %s83
    %v425 = vmul.f32 %v301, %v424
    %v426 = vadd.f32 %v423, %v425
    %v427 = vstv %s84
    %v428 = vmul.f32 %v316, %v427
    %v429 = vadd.f32 %v426, %v428
    %v430 = vstv %s85
    %v431 = vmul.f32 %v331, %v430
    %v432 = vadd.f32 %v429, %v431
    %v433 = vstv %s86
    %v434 = vmul.f32 %v346, %v433
    %v435 = vadd.f32 %v432, %v434
    %v436 = vstv %s87
    %v437 = vmul.f32 %v361, %v436
    %v438 = vadd.f32 %v435, %v437
    %v439 = vstv %s130
    %v440 = vadd.f32 %v438, %v439
    %v441 = vmul.f32 %v440, 0.01
    %v442 = vmax.f32 %v440, %v441
    %v443 = vstv %s88
    %v444 = vmul.f32 %v256, %v443
    %v445 = vstv %s89
    %v446 = vmul.f32 %v271, %v445
    %v447 = vadd.f32 %v444, %v446
    %v448 = vstv %s90
    %v449 = vmul.f32 %v286, %v448
    %v450 = vadd.f32 %v447, %v449
    %v451 = vstv %s91
    %v452 = vmul.f32 %v301, %v451
    %v453 = vadd.f32 %v450, %v452
    %v454 = vstv %s92
    %v455 = vmul.f32 %v316, %v454
    %v456 = vadd.f32 %v453, %v455
    %v457 = vstv %s93
    %v458 = vmul.f32 %v331, %v457
    %v459 = vadd.f32 %v456, %v458
    %v460 = vstv %s94
    %v461 = vmul.f32 %v346, %v460
    %v462 = vadd.f32 %v459, %v461
    %v463 = vstv %s95
    %v464 = vmul.f32 %v361, %v463
    %v465 = vadd.f32 %v462, %v464
    %v466 = vstv %s131
    %v467 = vadd.f32 %v465, %v466
    %v468 = vmul.f32 %v467, 0.01
    %v469 = vmax.f32 %v467, %v468
    %v470 = vstv %s96
    %v471 = vmul.f32 %v256, %v470
    %v472 = vstv %s97
    %v473 = vmul.f32 %v271, %v472
    %v474 = vadd.f32 %v471, %v473
    %v475 = vstv %s98
    %v476 = vmul.f32 %v286, %v475
    %v477 = vadd.f32 %v474, %v476
    %v478 = vstv %s99
    %v479 = vmul.f32 %v301, %v478
    %v480 = vadd.f32 %v477, %v479
    %v481 = vstv %s100
    %v482 = vmul.f32 %v316, %v481
    %v483 = vadd.f32 %v480, %v482
    %v484 = vstv %s101
    %v485 = vmul.f32 %v331, %v484
    %v486 = vadd.f32 %v483, %v485
    %v487 = vstv %s102
    %v488 = vmul.f32 %v346, %v487
    %v489 = vadd.f32 %v486, %v488
    %v490 = vstv %s103
    %v491 = vmul.f32 %v361, %v490
    %v492 = vadd.f32 %v489, %v491
    %v493 = vstv %s132
    %v494 = vadd.f32 %v492, %v493
    %v495 = vmul.f32 %v494, 0.01
    %v496 = vmax.f32 %v494, %v495
    %v497 = vstv %s104
    %v498 = vmul.f32 %v256, %v497
    %v499 = vstv %s105
    %v500 = vmul.f32 %v271, %v499
    %v501 = vadd.f32 %v498, %v500
    %v502 = vstv %s106
    %v503 = vmul.f32 %v286, %v502
    %v504 = vadd.f32 %v501, %v503
    %v505 = vstv %s107
    %v506 = vmul.f32 %v301, %v505
    %v507 = vadd.f32 %v504, %v506
    %v508 = vstv %s108
    %v509 = vmul.f32 %v316, %v508
    %v510 = vadd.f32 %v507, %v509
    %v511 = vstv %s109
    %v512 = vmul.f32 %v331, %v511
    %v513 = vadd.f32 %v510, %v512
    %v514 = vstv %s110
    %v515 = vmul.f32 %v346, %v514
    %v516 = vadd.f32 %v513, %v515
    %v517 = vstv %s111
    %v518 = vmul.f32 %v361, %v517
    %v519 = vadd.f32 %v516, %v518
    %v520 = vstv %s133
    %v521 = vadd.f32 %v519, %v520
    %v522 = vmul.f32 %v521, 0.01
    %v523 = vmax.f32 %v521, %v522
    %v524 = vstv %s112
    %v525 = vmul.f32 %v256, %v524
    %v526 = vstv %s113
    %v527 = vmul.f32 %v271, %v526
    %v528 = vadd.f32 %v525, %v527
    %v529 = vstv %s114
    %v530 = vmul.f32 %v286, %v529
    %v531 = vadd.f32 %v528, %v530
    %v532 = vstv %s115
    %v533 = vmul.f32 %v301, %v532
    %v534 = vadd.f32 %v531, %v533
    %v535 = vstv %s116
    %v536 = vmul.f32 %v316, %v535
    %v537 = vadd.f32 %v534, %v536
    %v538 = vstv %s117
    %v539 = vmul.f32 %v331, %v538
    %v540 = vadd.f32 %v537, %v539
    %v541 = vstv %s118
    %v542 = vmul.f32 %v346, %v541
    %v543 = vadd.f32 %v540, %v542
    %v544 = vstv %s119
    %v545 = vmul.f32 %v361, %v544
    %v546 = vadd.f32 %v543, %v545
    %v547 = vstv %s134
    %v548 = vadd.f32 %v546, %v547
    %v549 = vmul.f32 %v548, 0.01
    %v550 = vmax.f32 %v548, %v549
    %v551 = vstv %s120
    %v552 = vmul.f32 %v256, %v551
    %v553 = vstv %s121
    %v554 = vmul.f32 %v271, %v553
    %v555 = vadd.f32 %v552, %v554
    %v556 = vstv %s122
    %v557 = vmul.f32 %v286, %v556
    %v558 = vadd.f32 %v555, %v557
    %v559 = vstv %s123
    %v560 = vmul.f32 %v301, %v559
    %v561 = vadd.f32 %v558, %v560
    %v562 = vstv %s124
    %v563 = vmul.f32 %v316, %v562
    %v564 = vadd.f32 %v561, %v563
    %v565 = vstv %s125
    %v566 = vmul.f32 %v331, %v565
    %v567 = vadd.f32 %v564, %v566
    %v568 = vstv %s126
    %v569 = vmul.f32 %v346, %v568
    %v570 = vadd.f32 %v567, %v569
    %v571 = vstv %s127
    %v572 = vmul.f32 %v361, %v571
    %v573 = vadd.f32 %v570, %v572
    %v574 = vstv %s135
    %v575 = vadd.f32 %v573, %v574
    %v576 = vmul.f32 %v575, 0.01
    %v577 = vmax.f32 %v575, %v576
    %v578 = vstv %s136
    %v579 = vmul.f32 %v388, %v578
    %v580 = vstv %s137
    %v581 = vmul.f32 %v415, %v580
    %v582 = vadd.f32 %v579, %v581
    %v583 = vstv %s138
    %v584 = vmul.f32 %v442, %v583
    %v585 = vadd.f32 %v582, %v584
    %v586 = vstv %s139
    %v587 = vmul.f32 %v469, %v586
    %v588 = vadd.f32 %v585, %v587
    %v589 = vstv %s140
    %v590 = vmul.f32 %v496, %v589
    %v591 = vadd.f32 %v588, %v590
    %v592 = vstv %s141
    %v593 = vmul.f32 %v523, %v592
    %v594 = vadd.f32 %v591, %v593
    %v595 = vstv %s142
    %v596 = vmul.f32 %v550, %v595
    %v597 = vadd.f32 %v594, %v596
    %v598 = vstv %s143
    %v599 = vmul.f32 %v577, %v598
    %v600 = vadd.f32 %v597, %v599
    %v601 = vstv %s200
    %v602 = vadd.f32 %v600, %v601
    %v603 = vmul.f32 %v602, 0.01
    %v604 = vmax.f32 %v602, %v603
    %v605 = vstv %s144
    %v606 = vmul.f32 %v388, %v605
    %v607 = vstv %s145
    %v608 = vmul.f32 %v415, %v607
    %v609 = vadd.f32 %v606, %v608
    %v610 = vstv %s146
    %v611 = vmul.f32 %v442, %v610
    %v612 = vadd.f32 %v609, %v611
    %v613 = vstv %s147
    %v614 = vmul.f32 %v469, %v613
    %v615 = vadd.f32 %v612, %v614
    %v616 = vstv %s148
    %v617 = vmul.f32 %v496, %v616
    %v618 = vadd.f32 %v615, %v617
    %v619 = vstv %s149
    %v620 = vmul.f32 %v523, %v619
    %v621 = vadd.f32 %v618, %v620
    %v622 = vstv %s150
    %v623 = vmul.f32 %v550, %v622
    %v624 = vadd.f32 %v621, %v623
    %v625 = vstv %s151
    %v626 = vmul.f32 %v577, %v625
    %v627 = vadd.f32 %v624, %v626
    %v628 = vstv %s201
    %v629 = vadd.f32 %v627, %v628
    %v630 = vmul.f32 %v629, 0.01
    %v631 = vmax.f32 %v629, %v630
    %v632 = vstv %s152
    %v633 = vmul.f32 %v388, %v632
    %v634 = vstv %s153
    %v635 = vmul.f32 %v415, %v634
    %v636 = vadd.f32 %v633, %v635
    %v637 = vstv %s154
    %v638 = vmul.f32 %v442, %v637
    %v639 = vadd.f32 %v636, %v638
    %v640 = vstv %s155
    %v641 = vmul.f32 %v469, %v640
    %v642 = vadd.f32 %v639, %v641
    %v643 = vstv %s156
    %v644 = vmul.f32 %v496, %v643
    %v645 = vadd.f32 %v642, %v644
    %v646 = vstv %s157
    %v647 = vmul.f32 %v523, %v646
    %v648 = vadd.f32 %v645, %v647
    %v649 = vstv %s158
    %v650 = vmul.f32 %v550, %v649
    %v651 = vadd.f32 %v648, %v650
    %v652 = vstv %s159
    %v653 = vmul.f32 %v577, %v652
    %v654 = vadd.f32 %v651, %v653
    %v655 = vstv %s202
    %v656 = vadd.f32 %v654, %v655
    %v657 = vmul.f32 %v656, 0.01
    %v658 = vmax.f32 %v656, %v657
    %v659 = vstv %s160
    %v660 = vmul.f32 %v388, %v659
    %v661 = vstv %s161
    %v662 = vmul.f32 %v415, %v661
    %v663 = vadd.f32 %v660, %v662
    %v664 = vstv %s162
    %v665 = vmul.f32 %v442, %v664
    %v666 = vadd.f32 %v663, %v665
    %v667 = vstv %s163
    %v668 = vmul.f32 %v469, %v667
    %v669 = vadd.f32 %v666, %v668
    %v670 = vstv %s164
    %v671 = vmul.f32 %v496, %v670
    %v672 = vadd.f32 %v669, %v671
    %v673 = vstv %s165
    %v674 = vmul.f32 %v523, %v673
    %v675 = vadd.f32 %v672, %v674
    %v676 = vstv %s166
    %v677 = vmul.f32 %v550, %v676
    %v678 = vadd.f32 %v675, %v677
    %v679 = vstv %s167
    %v680 = vmul.f32 %v577, %v679
    %v681 = vadd.f32 %v678, %v680
    %v682 = vstv %s203
    %v683 = vadd.f32 %v681, %v682
    %v684 = vmul.f32 %v683, 0.01
    %v685 = vmax.f32 %v683, %v684
    %v686 = vstv %s168
    %v687 = vmul.f32 %v388, %v686
    %v688 = vstv %s169
    %v689 = vmul.f32 %v415, %v688
    %v690 = vadd.f32 %v687, %v689
    %v691 = vstv %s170
    %v692 = vmul.f32 %v442, %v691
    %v693 = vadd.f32 %v690, %v692
    %v694 = vstv %s171
    %v695 = vmul.f32 %v469, %v694
    %v696 = vadd.f32 %v693, %v695
    %v697 = vstv %s172
    %v698 = vmul.f32 %v496, %v697
    %v699 = vadd.f32 %v696, %v698
    %v700 = vstv %s173
    %v701 = vmul.f32 %v523, %v700
    %v702 = vadd.f32 %v699, %v701
    %v703 = vstv %s174
    %v704 = vmul.f32 %v550, %v703
    %v705 = vadd.f32 %v702, %v704
    %v706 = vstv %s175
    %v707 = vmul.f32 %v577, %v706
    %v708 = vadd.f32 %v705, %v707
    %v709 = vstv %s204
    %v710 = vadd.f32 %v708, %v709
    %v711 = vmul.f32 %v710, 0.01
    %v712 = vmax.f32 %v710, %v711
    %v713 = vstv %s176
    %v714 = vmul.f32 %v388, %v713
    %v715 = vstv %s177
    %v716 = vmul.f32 %v415, %v715
    %v717 = vadd.f32 %v714, %v716
    %v718 = vstv %s178
    %v719 = vmul.f32 %v442, %v718
    %v720 = vadd.f32 %v717, %v719
    %v721 = vstv %s179
    %v722 = vmul.f32 %v469, %v721
    %v723 = vadd.f32 %v720, %v722
    %v724 = vstv %s180
    %v725 = vmul.f32 %v496, %v724
    %v726 = vadd.f32 %v723, %v725
    %v727 = vstv %s181
    %v728 = vmul.f32 %v523, %v727
    %v729 = vadd.f32 %v726, %v728
    %v730 = vstv %s182
    %v731 = vmul.f32 %v550, %v730
    %v732 = vadd.f32 %v729, %v731
    %v733 = vstv %s183
    %v734 = vmul.f32 %v577, %v733
    %v735 = vadd.f32 %v732, %v734
    %v736 = vstv %s205
    %v737 = vadd.f32 %v735, %v736
    %v738 = vmul.f32 %v737, 0.01
    %v739 = vmax.f32 %v737, %v738
    %v740 = vstv %s184
    %v741 = vmul.f32 %v388, %v740
    %v742 = vstv %s185
    %v743 = vmul.f32 %v415, %v742
    %v744 = vadd.f32 %v741, %v743
    %v745 = vstv %s186
    %v746 = vmul.f32 %v442, %v745
    %v747 = vadd.f32 %v744, %v746
    %v748 = vstv %s187
    %v749 = vmul.f32 %v469, %v748
    %v750 = vadd.f32 %v747, %v749
    %v751 = vstv %s188
    %v752 = vmul.f32 %v496, %v751
    %v753 = vadd.f32 %v750, %v752
    %v754 = vstv %s189
    %v755 = vmul.f32 %v523, %v754
    %v756 = vadd.f32 %v753, %v755
    %v757 = vstv %s190
    %v758 = vmul.f32 %v550, %v757
    %v759 = vadd.f32 %v756, %v758
    %v760 = vstv %s191
    %v761 = vmul.f32 %v577, %v760
    %v762 = vadd.f32 %v759, %v761
    %v763 = vstv %s206
    %v764 = vadd.f32 %v762, %v763
    %v765 = vmul.f32 %v764, 0.01
    %v766 = vmax.f32 %v764, %v765
    %v767 = vstv %s192
    %v768 = vmul.f32 %v388, %v767
    %v769 = vstv %s193
    %v770 = vmul.f32 %v415, %v769
    %v771 = vadd.f32 %v768, %v770
    %v772 = vstv %s194
    %v773 = vmul.f32 %v442, %v772
    %v774 = vadd.f32 %v771, %v773
    %v775 = vstv %s195
    %v776 = vmul.f32 %v469, %v775
    %v777 = vadd.f32 %v774, %v776
    %v778 = vstv %s196
    %v779 = vmul.f32 %v496, %v778
    %v780 = vadd.f32 %v777, %v779
    %v781 = vstv %s197
    %v782 = vmul.f32 %v523, %v781
    %v783 = vadd.f32 %v780, %v782
    %v784 = vstv %s198
    %v785 = vmul.f32 %v550, %v784
    %v786 = vadd.f32 %v783, %v785
    %v787 = vstv %s199
    %v788 = vmul.f32 %v577, %v787
    %v789 = vadd.f32 %v786, %v788
    %v790 = vstv %s207
    %v791 = vadd.f32 %v789, %v790
    %v792 = vmul.f32 %v791, 0.01
    %v793 = vmax.f32 %v791, %v792
    %v794 = vstv %s208
    %v795 = vmul.f32 %v604, %v794
    %v796 = vstv %s209
    %v797 = vmul.f32 %v631, %v796
    %v798 = vadd.f32 %v795, %v797
    %v799 = vstv %s210
    %v800 = vmul.f32 %v658, %v799
    %v801 = vadd.f32 %v798, %v800
    %v802 = vstv %s211
    %v803 = vmul.f32 %v685, %v802
    %v804 = vadd.f32 %v801, %v803
    %v805 = vstv %s212
    %v806 = vmul.f32 %v712, %v805
    %v807 = vadd.f32 %v804, %v806
    %v808 = vstv %s213
    %v809 = vmul.f32 %v739, %v808
    %v810 = vadd.f32 %v807, %v809
    %v811 = vstv %s214
    %v812 = vmul.f32 %v766, %v811
    %v813 = vadd.f32 %v810, %v812
    %v814 = vstv %s215
    %v815 = vmul.f32 %v793, %v814
    %v816 = vadd.f32 %v813, %v815
    %v817 = vstv %s232
    %v818 = vadd.f32 %v816, %v817
    %v819 = vstv %s216
    %v820 = vmul.f32 %v604, %v819
    %v821 = vstv %s217
    %v822 = vmul.f32 %v631, %v821
    %v823 = vadd.f32 %v820, %v822
    %v824 = vstv %s218
    %v825 = vmul.f32 %v658, %v824
    %v826 = vadd.f32 %v823, %v825
    %v827 = vstv %s219
    %v828 = vmul.f32 %v685, %v827
    %v829 = vadd.f32 %v826, %v828
    %v830 = vstv %s220
    %v831 = vmul.f32 %v712, %v830
    %v832 = vadd.f32 %v829, %v831
    %v833 = vstv %s221
    %v834 = vmul.f32 %v739, %v833
    %v835 = vadd.f32 %v832, %v834
    %v836 = vstv %s222
    %v837 = vmul.f32 %v766, %v836
    %v838 = vadd.f32 %v835, %v837
    %v839 = vstv %s223
    %v840 = vmul.f32 %v793, %v839
    %v841 = vadd.f32 %v838, %v840
    %v842 = vstv %s233
    %v843 = vadd.f32 %v841, %v842
    %v844 = vstv %s224
    %v845 = vmul.f32 %v604, %v844
    %v846 = vstv %s225
    %v847 = vmul.f32 %v631, %v846
    %v848 = vadd.f32 %v845, %v847
    %v849 = vstv %s226
    %v850 = vmul.f32 %v658, %v849
    %v851 = vadd.f32 %v848, %v850
    %v852 = vstv %s227
    %v853 = vmul.f32 %v685, %v852
    %v854 = vadd.f32 %v851, %v853
    %v855 = vstv %s228
    %v856 = vmul.f32 %v712, %v855
    %v857 = vadd.f32 %v854, %v856
    %v858 = vstv %s229
    %v859 = vmul.f32 %v739, %v858
    %v860 = vadd.f32 %v857, %v859
    %v861 = vstv %s230
    %v862 = vmul.f32 %v766, %v861
    %v863 = vadd.f32 %v860, %v862
    %v864 = vstv %s231
    %v865 = vmul.f32 %v793, %v864
    %v866 = vadd.f32 %v863, %v865
    %v867 = vstv %s234
    %v868 = vadd.f32 %v866, %v867
    %869 = vst [vmem:[%s2] sm:$0xff] %v818
    %s870 = scalar_lea.vmem %s2, 8
    %871 = vst [vmem:[%s870] sm:$0xff] %v843
    %s872 = scalar_lea.vmem %s2, 16
    %873 = vst [vmem:[%s872] sm:$0xff] %v868
    // Predicated region
    $region14: #{irisnet_forward.1} parent=1 // pred_check
      _
    $region15: #{irisnet_forward.1} parent=1 // pred_check_branch
      %875 = sbr.rel (0) target = $region17
    $region16: #{irisnet_forward.1} parent=1 // pred_region
      _
    $region17: #{irisnet_forward.1} parent=1 // pred_fallthru
      _
    // Predicated region
    $region18: #{irisnet_forward.1} parent=1 // pred_check
      _
    $region19: #{irisnet_forward.1} parent=1 // pred_check_branch
      %877 = sbr.rel (0) target = $region21
    $region20: #{irisnet_forward.1} parent=1 // pred_region
      _
    $region21: #{irisnet_forward.1} parent=1 // pred_fallthru
      _
    %878 = vsyncpa [#allocation3], 1

</llo_original>
